<compile_context>
chip_gen: v6e
topology: v6e:2x2x1
jax: 0.10.0
libtpu: 0.0.40
codegen_flags: <defaults>
</compile_context>

<pallas_src>
import jax
import jax.numpy as jnp
from jax import lax
from jax.experimental import pallas as pl
from jax.experimental.pallas import tpu as pltpu


# Lane-tile upper bound: multiple of 128, sized so double-buffered working set
# stays tiny even on v7x's 64 MiB VMEM; large enough to amortize per-step overhead
# on v5e's single vst slot / low HBM BW.
_MAX_TN = 8192
_VMEM_LIMIT_BYTES = 32 * 1024 * 1024


def _pick_tn(hw):
    """Largest lane tile: full extent if small, else a 128-multiple (divisor if possible)."""
    if hw <= _MAX_TN:
        return hw                                   # full-extent block (always legal)
    for tn in range(_MAX_TN, 127, -128):
        if hw % tn == 0:
            return tn
    return _MAX_TN                                  # ragged final tile; Pallas masks the store


# ---------------- Pallas kernels (hot path) ----------------

def _layer_mask_kernel(x_ref, tcol_ref, w_ref, b_ref, o_ref):
    """ProximalEmbedding + 1x1 masking conv + ReLU on one (C, TN) tile.

    x_ref:    (C, TN)  decoder feature tile (one batch, TN = lane tile of H*W)
    tcol_ref: (C, 1)   column sums of `transit`
    w_ref:    (O, C)   1x1 conv weight
    b_ref:    (O, 1)   bias
    o_ref:    (O, TN)  relu(conv1x1(softmax_c(...)))
    """
    x = x_ref[...]                                      # (C, TN)
    C = x.shape[0]
    s = jnp.sum(x, axis=0, keepdims=True)               # (1, TN) channel sum per pixel
    logits = tcol_ref[...] * s                           # (C, TN)
    m = jnp.max(logits, axis=0, keepdims=True)
    e = jnp.exp(logits - m)                              # (C, TN)  EUP
    # Normalize after the contraction: 1 reciprocal per lane instead of C divides.
    inv = 1.0 / jnp.sum(e, axis=0, keepdims=True)        # (1, TN)
    w = w_ref[...]                                       # (O, C)
    # Tiny contraction (C<=8, O=3): exact-f32 VPU broadcast-FMA chain, no MXU.
    acc = w[:, 0:1] * e[0:1, :]
    for c in range(1, C):
        acc = acc + w[:, c:c + 1] * e[c:c + 1, :]
    o_ref[...] = jnp.maximum(acc * inv + b_ref[...], 0.0)


def _make_global_kernel(n_layers):
    """Fused concat + global 1x1 conv + clamp + |log_softmax_c| over one (O, TN) tile."""
    def kernel(*refs):
        om_refs = refs[:n_layers]                        # each (O_l, TN)
        w_refs = refs[n_layers:2 * n_layers]             # each (O, O_l) slice of glob_w
        b_ref = refs[2 * n_layers]                       # (O, 1)
        o_ref = refs[2 * n_layers + 1]                   # (O, TN)
        z = jnp.broadcast_to(b_ref[...], o_ref.shape)
        for l in range(n_layers):                        # concat fused as per-layer FMA
            om = om_refs[l][...]
            w = w_refs[l][...]
            for c in range(om.shape[0]):
                z = z + w[:, c:c + 1] * om[c:c + 1, :]
        z = jnp.clip(z, 1e-6, 1e6)
        m = jnp.max(z, axis=0, keepdims=True)
        lse = m + jnp.log(jnp.sum(jnp.exp(z - m), axis=0, keepdims=True))
        o_ref[...] = jnp.abs(z - lse)
    return kernel


# ---------------- wrappers (tiled, transpose-free) ----------------

def layer_mask(x_nchw, transit, w, b):
    """softmax-embedding + masking Conv2d(1x1) + ReLU. NCHW in/out, no transposes."""
    B, C, H, W = x_nchw.shape
    O = w.shape[0]
    HW = H * W
    TN = _pick_tn(HW)
    grid = (B, pl.cdiv(HW, TN))
    xk = x_nchw.reshape(B, C, HW).astype(jnp.float32)
    tcol = jnp.sum(transit, axis=0).reshape(C, 1).astype(jnp.float32)
    out = pl.pallas_call(
        _layer_mask_kernel,
        out_shape=jax.ShapeDtypeStruct((B, O, HW), jnp.float32),
        grid=grid,
        in_specs=[
            pl.BlockSpec((None, C, TN), lambda bi, j: (bi, 0, j)),   # x: tiled over lanes
            pl.BlockSpec((C, 1), lambda bi, j: (0, 0)),              # tcol: resident
            pl.BlockSpec((O, C), lambda bi, j: (0, 0)),              # w: resident
            pl.BlockSpec((O, 1), lambda bi, j: (0, 0)),              # b: resident
        ],
        out_specs=pl.BlockSpec((None, O, TN), lambda bi, j: (bi, 0, j)),
        compiler_params=pltpu.CompilerParams(
            dimension_semantics=("parallel", "parallel"),
            vmem_limit_bytes=_VMEM_LIMIT_BYTES),
    )(xk, tcol, w.astype(jnp.float32), b.reshape(O, 1).astype(jnp.float32))
    return out.reshape(B, O, H, W)


def global_mask(object_layer_masks, glob_w, glob_b):
    """Fused concat + global Conv2d(1x1) + clamp + |log_softmax_c|. NCHW in/out."""
    L = len(object_layer_masks)
    B, O_in, H, W = object_layer_masks[0].shape
    O = glob_w.shape[0]
    HW = H * W
    TN = _pick_tn(HW)
    grid = (B, pl.cdiv(HW, TN))
    oms = [om.reshape(B, O_in, HW).astype(jnp.float32) for om in object_layer_masks]
    w_slices = [glob_w[:, l * O_in:(l + 1) * O_in].astype(jnp.float32) for l in range(L)]
    om_specs = [pl.BlockSpec((None, O_in, TN), lambda bi, j: (bi, 0, j)) for _ in range(L)]
    w_specs = [pl.BlockSpec((O, O_in), lambda bi, j: (0, 0)) for _ in range(L)]
    b_spec = pl.BlockSpec((O, 1), lambda bi, j: (0, 0))
    out = pl.pallas_call(
        _make_global_kernel(L),
        out_shape=jax.ShapeDtypeStruct((B, O, HW), jnp.float32),
        grid=grid,
        in_specs=om_specs + w_specs + [b_spec],
        out_specs=pl.BlockSpec((None, O, TN), lambda bi, j: (bi, 0, j)),
        compiler_params=pltpu.CompilerParams(
            dimension_semantics=("parallel", "parallel"),
            vmem_limit_bytes=_VMEM_LIMIT_BYTES),
    )(*oms, *w_slices, glob_b.reshape(O, 1).astype(jnp.float32))
    return out.reshape(B, O, H, W)


# ---------------- plain-JAX glue (synthetic decoder, resize) ----------------

def conv2d_nchw(x, w, b, stride=1, padding=1):
    y = lax.conv_general_dilated(
        x, w, window_strides=(stride, stride),
        padding=[(padding, padding), (padding, padding)],
        dimension_numbers=('NCHW', 'OIHW', 'NCHW'))
    return y + b[None, :, None, None]


def nearest_resize_nchw(x, h, w):
    # matches F.interpolate(mode='nearest'): src = floor(dst * in/out)
    Hi, Wi = x.shape[2], x.shape[3]
    rows = (jnp.arange(h) * Hi) // h
    cols = (jnp.arange(w) * Wi) // w
    return x[:, :, rows][:, :, :, cols]


def decoder_forward(x, params):
    # TODO(synk): forward-hook collection on an arbitrary external decoder is framework
    # plumbing; a fixed synthetic 2-conv decoder in plain JAX stands in for it here.
    y0 = conv2d_nchw(x, params['dec_w0'], params['dec_b0'], stride=1, padding=1)
    a0 = jax.nn.relu(y0)
    y1 = conv2d_nchw(a0, params['dec_w1'], params['dec_b1'], stride=2, padding=1)
    return {0: y0, 1: y1}          # the hook collector `d`


def object_mask_forward(x, params):
    """ObjectMask.forward(x, train_embed=False) -> (B, n_objects, H, W)."""
    h, w = x.shape[2], x.shape[3]
    d = decoder_forward(x, params)
    object_layer_masks = []
    for i in range(len(params['transit'])):
        om = layer_mask(d[i], params['transit'][i],
                        params['mask_w'][i], params['mask_b'][i])
        if om.shape[2:4] != (h, w):
            om = nearest_resize_nchw(om, h, w)
        object_layer_masks.append(om)
    # channel-concat is fused into the global kernel (no (B, L*O, H, W) HBM tensor)
    return global_mask(object_layer_masks, params['glob_w'], params['glob_b'])


# ---------------- pure-JAX reference for verification ----------------

def object_mask_reference(x, params):
    h, w = x.shape[2], x.shape[3]
    d = decoder_forward(x, params)
    masks = []
    for i in range(len(params['transit'])):
        logits = jnp.einsum('ijkl,mn->inkl', d[i], params['transit'][i],
                            precision=lax.Precision.HIGHEST)
        mass = jax.nn.softmax(logits, axis=1)
        om = jnp.einsum('oc,bchw->bohw', params['mask_w'][i], mass,
                        precision=lax.Precision.HIGHEST)
        om = jax.nn.relu(om + params['mask_b'][i][None, :, None, None])
        if om.shape[2:4] != (h, w):
            om = nearest_resize_nchw(om, h, w)
        masks.append(om)
    cat = jnp.concatenate(masks, axis=1)
    z = jnp.einsum('oc,bchw->bohw', params['glob_w'], cat,
                   precision=lax.Precision.HIGHEST)
    z = jnp.clip(z + params['glob_b'][None, :, None, None], 1e-6, 1e6)
    return jnp.abs(jax.nn.log_softmax(z, axis=1))


if __name__ == "__main__":
    key = jax.random.PRNGKey(0)
    B, C_IN, H, W = 2, 4, 16, 16
    conv_sizes = [8, 6]
    n_objects = 3
    n_layers = len(conv_sizes)

    ks = jax.random.split(key, 10)
    params = {
        'dec_w0': jax.random.normal(ks[0], (conv_sizes[0], C_IN, 3, 3), jnp.float32) * 0.1,
        'dec_b0': jnp.zeros((conv_sizes[0],), jnp.float32),
        'dec_w1': jax.random.normal(ks[1], (conv_sizes[1], conv_sizes[0], 3, 3), jnp.float32) * 0.1,
        'dec_b1': jnp.zeros((conv_sizes[1],), jnp.float32),
        # ProximalEmbedding.transit: nn.Parameter(torch.ones(n_channels, n_channels))
        'transit': [jnp.ones((s, s), jnp.float32) for s in conv_sizes],
        # masking_layers: Conv2d(s, n_objects, 1) -> weight (n_objects, s), bias (n_objects,)
        'mask_w': [jax.random.normal(ks[2 + i], (n_objects, s), jnp.float32) * 0.2
                   for i, s in enumerate(conv_sizes)],
        'mask_b': [jax.random.normal(ks[4 + i], (n_objects,), jnp.float32) * 0.1
                   for i in range(n_layers)],
        # global_masking_layer: Conv2d(n_objects*n_layers, n_objects, 1)
        'glob_w': jax.random.normal(ks[6], (n_objects, n_objects * n_layers), jnp.float32) * 0.2,
        'glob_b': jax.random.normal(ks[7], (n_objects,), jnp.float32) * 0.1,
    }

    x = jax.random.normal(ks[8], (B, C_IN, H, W), jnp.float32)

    # jit the whole forward so the small per-layer pallas_calls are dispatched/overlapped by XLA
    fwd = jax.jit(object_mask_forward)
    out = jax.block_until_ready(fwd(x, params))
    assert out.shape == (B, n_objects, H, W), out.shape

    ref = object_mask_reference(x, params)
    assert jnp.allclose(out, ref, rtol=1e-4, atol=1e-4), \
        float(jnp.max(jnp.abs(out - ref)))

    print("KERNEL_OK")
</pallas_src>

<mosaic_0001>
module attributes {stable_mosaic.version = 11 : i64} {
  func.func @_layer_mask_kernel(%arg0: i32, %arg1: i32, %arg2: memref<1x6x64xf32, #tpu.memory_space<vmem>>, %arg3: memref<6x1xf32, #tpu.memory_space<vmem>>, %arg4: memref<3x6xf32, #tpu.memory_space<vmem>>, %arg5: memref<3x1xf32, #tpu.memory_space<vmem>>, %arg6: memref<1x3x64xf32, #tpu.memory_space<vmem>>) attributes {dimension_semantics = [#tpu.dimension_semantics<parallel>, #tpu.dimension_semantics<parallel>], iteration_bounds = array<i64: 2, 1>, scalar_prefetch = 0 : i64, scratch_operands = 0 : i64, tpu.core_type = #tpu.core_type<tc>, window_params = [{transform_indices = @transform_0, window_bounds = array<i64: 1, 6, 64>}, {pipeline_mode = #tpu.pipeline_mode<synchronous>, transform_indices = @transform_1, window_bounds = array<i64: 6, 1>}, {pipeline_mode = #tpu.pipeline_mode<synchronous>, transform_indices = @transform_2, window_bounds = array<i64: 3, 6>}, {pipeline_mode = #tpu.pipeline_mode<synchronous>, transform_indices = @transform_3, window_bounds = array<i64: 3, 1>}, {transform_indices = @transform_4, window_bounds = array<i64: 1, 3, 64>}]} {
    %c0 = arith.constant 0 : index
    %c0_0 = arith.constant 0 : index
    %c0_1 = arith.constant 0 : index
    %0 = vector.load %arg2[%c0, %c0_0, %c0_1] : memref<1x6x64xf32, #tpu.memory_space<vmem>>, vector<1x6x64xf32>
    %1 = vector.shape_cast %0 : vector<1x6x64xf32> to vector<6x64xf32>
    %cst = arith.constant dense<0.000000e+00> : vector<64xf32>
    %2 = vector.multi_reduction <add>, %1, %cst [0] : vector<6x64xf32> to vector<64xf32>
    %3 = vector.shape_cast %2 : vector<64xf32> to vector<1x64xf32>
    %c0_2 = arith.constant 0 : index
    %c0_3 = arith.constant 0 : index
    %4 = vector.load %arg3[%c0_2, %c0_3] : memref<6x1xf32, #tpu.memory_space<vmem>>, vector<6x1xf32>
    %5 = vector.broadcast %4 : vector<6x1xf32> to vector<6x64xf32>
    %6 = vector.broadcast %3 : vector<1x64xf32> to vector<6x64xf32>
    %7 = arith.mulf %5, %6 : vector<6x64xf32>
    %cst_4 = arith.constant dense<0xFF800000> : vector<64xf32>
    %8 = vector.multi_reduction <maximumf>, %7, %cst_4 [0] : vector<6x64xf32> to vector<64xf32>
    %9 = vector.shape_cast %8 : vector<64xf32> to vector<1x64xf32>
    %10 = vector.broadcast %9 : vector<1x64xf32> to vector<6x64xf32>
    %11 = arith.subf %7, %10 : vector<6x64xf32>
    %12 = math.exp %11 : vector<6x64xf32>
    %cst_5 = arith.constant dense<0.000000e+00> : vector<64xf32>
    %13 = vector.multi_reduction <add>, %12, %cst_5 [0] : vector<6x64xf32> to vector<64xf32>
    %14 = vector.shape_cast %13 : vector<64xf32> to vector<1x64xf32>
    %cst_6 = arith.constant 1.000000e+00 : f32
    %15 = vector.broadcast %cst_6 : f32 to vector<1x64xf32>
    %16 = arith.divf %15, %14 : vector<1x64xf32>
    %c0_7 = arith.constant 0 : index
    %c0_8 = arith.constant 0 : index
    %17 = vector.load %arg4[%c0_7, %c0_8] : memref<3x6xf32, #tpu.memory_space<vmem>>, vector<3x6xf32>
    %18 = vector.extract_strided_slice %17 {offsets = [0, 0], sizes = [3, 1], strides = [1, 1]} : vector<3x6xf32> to vector<3x1xf32>
    %19 = vector.extract_strided_slice %12 {offsets = [0, 0], sizes = [1, 64], strides = [1, 1]} : vector<6x64xf32> to vector<1x64xf32>
    %20 = vector.broadcast %18 : vector<3x1xf32> to vector<3x64xf32>
    %21 = vector.broadcast %19 : vector<1x64xf32> to vector<3x64xf32>
    %22 = arith.mulf %20, %21 : vector<3x64xf32>
    %23 = vector.extract_strided_slice %17 {offsets = [0, 1], sizes = [3, 1], strides = [1, 1]} : vector<3x6xf32> to vector<3x1xf32>
    %24 = vector.extract_strided_slice %12 {offsets = [1, 0], sizes = [1, 64], strides = [1, 1]} : vector<6x64xf32> to vector<1x64xf32>
    %25 = vector.broadcast %23 : vector<3x1xf32> to vector<3x64xf32>
    %26 = vector.broadcast %24 : vector<1x64xf32> to vector<3x64xf32>
    %27 = arith.mulf %25, %26 : vector<3x64xf32>
    %28 = arith.addf %22, %27 : vector<3x64xf32>
    %29 = vector.extract_strided_slice %17 {offsets = [0, 2], sizes = [3, 1], strides = [1, 1]} : vector<3x6xf32> to vector<3x1xf32>
    %30 = vector.extract_strided_slice %12 {offsets = [2, 0], sizes = [1, 64], strides = [1, 1]} : vector<6x64xf32> to vector<1x64xf32>
    %31 = vector.broadcast %29 : vector<3x1xf32> to vector<3x64xf32>
    %32 = vector.broadcast %30 : vector<1x64xf32> to vector<3x64xf32>
    %33 = arith.mulf %31, %32 : vector<3x64xf32>
    %34 = arith.addf %28, %33 : vector<3x64xf32>
    %35 = vector.extract_strided_slice %17 {offsets = [0, 3], sizes = [3, 1], strides = [1, 1]} : vector<3x6xf32> to vector<3x1xf32>
    %36 = vector.extract_strided_slice %12 {offsets = [3, 0], sizes = [1, 64], strides = [1, 1]} : vector<6x64xf32> to vector<1x64xf32>
    %37 = vector.broadcast %35 : vector<3x1xf32> to vector<3x64xf32>
    %38 = vector.broadcast %36 : vector<1x64xf32> to vector<3x64xf32>
    %39 = arith.mulf %37, %38 : vector<3x64xf32>
    %40 = arith.addf %34, %39 : vector<3x64xf32>
    %41 = vector.extract_strided_slice %17 {offsets = [0, 4], sizes = [3, 1], strides = [1, 1]} : vector<3x6xf32> to vector<3x1xf32>
    %42 = vector.extract_strided_slice %12 {offsets = [4, 0], sizes = [1, 64], strides = [1, 1]} : vector<6x64xf32> to vector<1x64xf32>
    %43 = vector.broadcast %41 : vector<3x1xf32> to vector<3x64xf32>
    %44 = vector.broadcast %42 : vector<1x64xf32> to vector<3x64xf32>
    %45 = arith.mulf %43, %44 : vector<3x64xf32>
    %46 = arith.addf %40, %45 : vector<3x64xf32>
    %47 = vector.extract_strided_slice %17 {offsets = [0, 5], sizes = [3, 1], strides = [1, 1]} : vector<3x6xf32> to vector<3x1xf32>
    %48 = vector.extract_strided_slice %12 {offsets = [5, 0], sizes = [1, 64], strides = [1, 1]} : vector<6x64xf32> to vector<1x64xf32>
    %49 = vector.broadcast %47 : vector<3x1xf32> to vector<3x64xf32>
    %50 = vector.broadcast %48 : vector<1x64xf32> to vector<3x64xf32>
    %51 = arith.mulf %49, %50 : vector<3x64xf32>
    %52 = arith.addf %46, %51 : vector<3x64xf32>
    %53 = vector.broadcast %16 : vector<1x64xf32> to vector<3x64xf32>
    %54 = arith.mulf %52, %53 : vector<3x64xf32>
    %c0_9 = arith.constant 0 : index
    %c0_10 = arith.constant 0 : index
    %55 = vector.load %arg5[%c0_9, %c0_10] : memref<3x1xf32, #tpu.memory_space<vmem>>, vector<3x1xf32>
    %56 = vector.broadcast %55 : vector<3x1xf32> to vector<3x64xf32>
    %57 = arith.addf %54, %56 : vector<3x64xf32>
    %cst_11 = arith.constant 0.000000e+00 : f32
    %58 = vector.broadcast %cst_11 : f32 to vector<3x64xf32>
    %59 = arith.maximumf %57, %58 : vector<3x64xf32>
    %c0_12 = arith.constant 0 : index
    %c0_13 = arith.constant 0 : index
    %c0_14 = arith.constant 0 : index
    %60 = vector.load %arg6[%c0_12, %c0_13, %c0_14] : memref<1x3x64xf32, #tpu.memory_space<vmem>>, vector<1x3x64xf32>
    %61 = vector.shape_cast %60 : vector<1x3x64xf32> to vector<3x64xf32>
    %62 = vector.shape_cast %59 : vector<3x64xf32> to vector<1x3x64xf32>
    tpu.vector_store %arg6[%c0_12, %c0_13, %c0_14], %62 {strides = array<i32>} : memref<1x3x64xf32, #tpu.memory_space<vmem>>, vector<1x3x64xf32>,
    return
  }
  func.func @transform_0(%arg0: i32, %arg1: i32) -> (i32, i32, i32) {
    %c0_i32 = arith.constant 0 : i32
    %c0_i32_0 = arith.constant 0 : i32
    return %arg0, %c0_i32, %arg1 : i32, i32, i32
  }
  func.func @transform_1(%arg0: i32, %arg1: i32) -> (i32, i32) {
    %c0_i32 = arith.constant 0 : i32
    %c0_i32_0 = arith.constant 0 : i32
    %c0_i32_1 = arith.constant 0 : i32
    return %c0_i32, %c0_i32_0 : i32, i32
  }
  func.func @transform_2(%arg0: i32, %arg1: i32) -> (i32, i32) {
    %c0_i32 = arith.constant 0 : i32
    %c0_i32_0 = arith.constant 0 : i32
    %c0_i32_1 = arith.constant 0 : i32
    return %c0_i32, %c0_i32_0 : i32, i32
  }
  func.func @transform_3(%arg0: i32, %arg1: i32) -> (i32, i32) {
    %c0_i32 = arith.constant 0 : i32
    %c0_i32_0 = arith.constant 0 : i32
    %c0_i32_1 = arith.constant 0 : i32
    return %c0_i32, %c0_i32_0 : i32, i32
  }
  func.func @transform_4(%arg0: i32, %arg1: i32) -> (i32, i32, i32) {
    %c0_i32 = arith.constant 0 : i32
    %c0_i32_0 = arith.constant 0 : i32
    return %arg0, %c0_i32, %arg1 : i32, i32, i32
  }
}

module attributes {stable_mosaic.version = 11 : i64} {
  func.func @_layer_mask_kernel(%arg0: i32, %arg1: i32, %arg2: memref<1x8x256xf32, #tpu.memory_space<vmem>>, %arg3: memref<8x1xf32, #tpu.memory_space<vmem>>, %arg4: memref<3x8xf32, #tpu.memory_space<vmem>>, %arg5: memref<3x1xf32, #tpu.memory_space<vmem>>, %arg6: memref<1x3x256xf32, #tpu.memory_space<vmem>>) attributes {dimension_semantics = [#tpu.dimension_semantics<parallel>, #tpu.dimension_semantics<parallel>], iteration_bounds = array<i64: 2, 1>, scalar_prefetch = 0 : i64, scratch_operands = 0 : i64, tpu.core_type = #tpu.core_type<tc>, window_params = [{transform_indices = @transform_0, window_bounds = array<i64: 1, 8, 256>}, {pipeline_mode = #tpu.pipeline_mode<synchronous>, transform_indices = @transform_1, window_bounds = array<i64: 8, 1>}, {pipeline_mode = #tpu.pipeline_mode<synchronous>, transform_indices = @transform_2, window_bounds = array<i64: 3, 8>}, {pipeline_mode = #tpu.pipeline_mode<synchronous>, transform_indices = @transform_3, window_bounds = array<i64: 3, 1>}, {transform_indices = @transform_4, window_bounds = array<i64: 1, 3, 256>}]} {
    %c0 = arith.constant 0 : index
    %c0_0 = arith.constant 0 : index
    %c0_1 = arith.constant 0 : index
    %0 = vector.load %arg2[%c0, %c0_0, %c0_1] : memref<1x8x256xf32, #tpu.memory_space<vmem>>, vector<1x8x256xf32>
    %1 = vector.shape_cast %0 : vector<1x8x256xf32> to vector<8x256xf32>
    %cst = arith.constant dense<0.000000e+00> : vector<256xf32>
    %2 = vector.multi_reduction <add>, %1, %cst [0] : vector<8x256xf32> to vector<256xf32>
    %3 = vector.shape_cast %2 : vector<256xf32> to vector<1x256xf32>
    %c0_2 = arith.constant 0 : index
    %c0_3 = arith.constant 0 : index
    %4 = vector.load %arg3[%c0_2, %c0_3] : memref<8x1xf32, #tpu.memory_space<vmem>>, vector<8x1xf32>
    %5 = vector.broadcast %4 : vector<8x1xf32> to vector<8x256xf32>
    %6 = vector.broadcast %3 : vector<1x256xf32> to vector<8x256xf32>
    %7 = arith.mulf %5, %6 : vector<8x256xf32>
    %cst_4 = arith.constant dense<0xFF800000> : vector<256xf32>
    %8 = vector.multi_reduction <maximumf>, %7, %cst_4 [0] : vector<8x256xf32> to vector<256xf32>
    %9 = vector.shape_cast %8 : vector<256xf32> to vector<1x256xf32>
    %10 = vector.broadcast %9 : vector<1x256xf32> to vector<8x256xf32>
    %11 = arith.subf %7, %10 : vector<8x256xf32>
    %12 = math.exp %11 : vector<8x256xf32>
    %cst_5 = arith.constant dense<0.000000e+00> : vector<256xf32>
    %13 = vector.multi_reduction <add>, %12, %cst_5 [0] : vector<8x256xf32> to vector<256xf32>
    %14 = vector.shape_cast %13 : vector<256xf32> to vector<1x256xf32>
    %cst_6 = arith.constant 1.000000e+00 : f32
    %15 = vector.broadcast %cst_6 : f32 to vector<1x256xf32>
    %16 = arith.divf %15, %14 : vector<1x256xf32>
    %c0_7 = arith.constant 0 : index
    %c0_8 = arith.constant 0 : index
    %17 = vector.load %arg4[%c0_7, %c0_8] : memref<3x8xf32, #tpu.memory_space<vmem>>, vector<3x8xf32>
    %18 = vector.extract_strided_slice %17 {offsets = [0, 0], sizes = [3, 1], strides = [1, 1]} : vector<3x8xf32> to vector<3x1xf32>
    %19 = vector.extract_strided_slice %12 {offsets = [0, 0], sizes = [1, 256], strides = [1, 1]} : vector<8x256xf32> to vector<1x256xf32>
    %20 = vector.broadcast %18 : vector<3x1xf32> to vector<3x256xf32>
    %21 = vector.broadcast %19 : vector<1x256xf32> to vector<3x256xf32>
    %22 = arith.mulf %20, %21 : vector<3x256xf32>
    %23 = vector.extract_strided_slice %17 {offsets = [0, 1], sizes = [3, 1], strides = [1, 1]} : vector<3x8xf32> to vector<3x1xf32>
    %24 = vector.extract_strided_slice %12 {offsets = [1, 0], sizes = [1, 256], strides = [1, 1]} : vector<8x256xf32> to vector<1x256xf32>
    %25 = vector.broadcast %23 : vector<3x1xf32> to vector<3x256xf32>
    %26 = vector.broadcast %24 : vector<1x256xf32> to vector<3x256xf32>
    %27 = arith.mulf %25, %26 : vector<3x256xf32>
    %28 = arith.addf %22, %27 : vector<3x256xf32>
    %29 = vector.extract_strided_slice %17 {offsets = [0, 2], sizes = [3, 1], strides = [1, 1]} : vector<3x8xf32> to vector<3x1xf32>
    %30 = vector.extract_strided_slice %12 {offsets = [2, 0], sizes = [1, 256], strides = [1, 1]} : vector<8x256xf32> to vector<1x256xf32>
    %31 = vector.broadcast %29 : vector<3x1xf32> to vector<3x256xf32>
    %32 = vector.broadcast %30 : vector<1x256xf32> to vector<3x256xf32>
    %33 = arith.mulf %31, %32 : vector<3x256xf32>
    %34 = arith.addf %28, %33 : vector<3x256xf32>
    %35 = vector.extract_strided_slice %17 {offsets = [0, 3], sizes = [3, 1], strides = [1, 1]} : vector<3x8xf32> to vector<3x1xf32>
    %36 = vector.extract_strided_slice %12 {offsets = [3, 0], sizes = [1, 256], strides = [1, 1]} : vector<8x256xf32> to vector<1x256xf32>
    %37 = vector.broadcast %35 : vector<3x1xf32> to vector<3x256xf32>
    %38 = vector.broadcast %36 : vector<1x256xf32> to vector<3x256xf32>
    %39 = arith.mulf %37, %38 : vector<3x256xf32>
    %40 = arith.addf %34, %39 : vector<3x256xf32>
    %41 = vector.extract_strided_slice %17 {offsets = [0, 4], sizes = [3, 1], strides = [1, 1]} : vector<3x8xf32> to vector<3x1xf32>
    %42 = vector.extract_strided_slice %12 {offsets = [4, 0], sizes = [1, 256], strides = [1, 1]} : vector<8x256xf32> to vector<1x256xf32>
    %43 = vector.broadcast %41 : vector<3x1xf32> to vector<3x256xf32>
    %44 = vector.broadcast %42 : vector<1x256xf32> to vector<3x256xf32>
    %45 = arith.mulf %43, %44 : vector<3x256xf32>
    %46 = arith.addf %40, %45 : vector<3x256xf32>
    %47 = vector.extract_strided_slice %17 {offsets = [0, 5], sizes = [3, 1], strides = [1, 1]} : vector<3x8xf32> to vector<3x1xf32>
    %48 = vector.extract_strided_slice %12 {offsets = [5, 0], sizes = [1, 256], strides = [1, 1]} : vector<8x256xf32> to vector<1x256xf32>
    %49 = vector.broadcast %47 : vector<3x1xf32> to vector<3x256xf32>
    %50 = vector.broadcast %48 : vector<1x256xf32> to vector<3x256xf32>
    %51 = arith.mulf %49, %50 : vector<3x256xf32>
    %52 = arith.addf %46, %51 : vector<3x256xf32>
    %53 = vector.extract_strided_slice %17 {offsets = [0, 6], sizes = [3, 1], strides = [1, 1]} : vector<3x8xf32> to vector<3x1xf32>
    %54 = vector.extract_strided_slice %12 {offsets = [6, 0], sizes = [1, 256], strides = [1, 1]} : vector<8x256xf32> to vector<1x256xf32>
    %55 = vector.broadcast %53 : vector<3x1xf32> to vector<3x256xf32>
    %56 = vector.broadcast %54 : vector<1x256xf32> to vector<3x256xf32>
    %57 = arith.mulf %55, %56 : vector<3x256xf32>
    %58 = arith.addf %52, %57 : vector<3x256xf32>
    %59 = vector.extract_strided_slice %17 {offsets = [0, 7], sizes = [3, 1], strides = [1, 1]} : vector<3x8xf32> to vector<3x1xf32>
    %60 = vector.extract_strided_slice %12 {offsets = [7, 0], sizes = [1, 256], strides = [1, 1]} : vector<8x256xf32> to vector<1x256xf32>
    %61 = vector.broadcast %59 : vector<3x1xf32> to vector<3x256xf32>
    %62 = vector.broadcast %60 : vector<1x256xf32> to vector<3x256xf32>
    %63 = arith.mulf %61, %62 : vector<3x256xf32>
    %64 = arith.addf %58, %63 : vector<3x256xf32>
    %65 = vector.broadcast %16 : vector<1x256xf32> to vector<3x256xf32>
    %66 = arith.mulf %64, %65 : vector<3x256xf32>
    %c0_9 = arith.constant 0 : index
    %c0_10 = arith.constant 0 : index
    %67 = vector.load %arg5[%c0_9, %c0_10] : memref<3x1xf32, #tpu.memory_space<vmem>>, vector<3x1xf32>
    %68 = vector.broadcast %67 : vector<3x1xf32> to vector<3x256xf32>
    %69 = arith.addf %66, %68 : vector<3x256xf32>
    %cst_11 = arith.constant 0.000000e+00 : f32
    %70 = vector.broadcast %cst_11 : f32 to vector<3x256xf32>
    %71 = arith.maximumf %69, %70 : vector<3x256xf32>
    %c0_12 = arith.constant 0 : index
    %c0_13 = arith.constant 0 : index
    %c0_14 = arith.constant 0 : index
    %72 = vector.load %arg6[%c0_12, %c0_13, %c0_14] : memref<1x3x256xf32, #tpu.memory_space<vmem>>, vector<1x3x256xf32>
    %73 = vector.shape_cast %72 : vector<1x3x256xf32> to vector<3x256xf32>
    %74 = vector.shape_cast %71 : vector<3x256xf32> to vector<1x3x256xf32>
    tpu.vector_store %arg6[%c0_12, %c0_13, %c0_14], %74 {strides = array<i32>} : memref<1x3x256xf32, #tpu.memory_space<vmem>>, vector<1x3x256xf32>,
    return
  }
  func.func @transform_0(%arg0: i32, %arg1: i32) -> (i32, i32, i32) {
    %c0_i32 = arith.constant 0 : i32
    %c0_i32_0 = arith.constant 0 : i32
    return %arg0, %c0_i32, %arg1 : i32, i32, i32
  }
  func.func @transform_1(%arg0: i32, %arg1: i32) -> (i32, i32) {
    %c0_i32 = arith.constant 0 : i32
    %c0_i32_0 = arith.constant 0 : i32
    %c0_i32_1 = arith.constant 0 : i32
    return %c0_i32, %c0_i32_0 : i32, i32
  }
  func.func @transform_2(%arg0: i32, %arg1: i32) -> (i32, i32) {
    %c0_i32 = arith.constant 0 : i32
    %c0_i32_0 = arith.constant 0 : i32
    %c0_i32_1 = arith.constant 0 : i32
    return %c0_i32, %c0_i32_0 : i32, i32
  }
  func.func @transform_3(%arg0: i32, %arg1: i32) -> (i32, i32) {
    %c0_i32 = arith.constant 0 : i32
    %c0_i32_0 = arith.constant 0 : i32
    %c0_i32_1 = arith.constant 0 : i32
    return %c0_i32, %c0_i32_0 : i32, i32
  }
  func.func @transform_4(%arg0: i32, %arg1: i32) -> (i32, i32, i32) {
    %c0_i32 = arith.constant 0 : i32
    %c0_i32_0 = arith.constant 0 : i32
    return %arg0, %c0_i32, %arg1 : i32, i32, i32
  }
}

module attributes {stable_mosaic.version = 11 : i64} {
  func.func @kernel(%arg0: i32, %arg1: i32, %arg2: memref<1x3x256xf32, #tpu.memory_space<vmem>>, %arg3: memref<1x3x256xf32, #tpu.memory_space<vmem>>, %arg4: memref<3x3xf32, #tpu.memory_space<vmem>>, %arg5: memref<3x3xf32, #tpu.memory_space<vmem>>, %arg6: memref<3x1xf32, #tpu.memory_space<vmem>>, %arg7: memref<1x3x256xf32, #tpu.memory_space<vmem>>) attributes {dimension_semantics = [#tpu.dimension_semantics<parallel>, #tpu.dimension_semantics<parallel>], iteration_bounds = array<i64: 2, 1>, scalar_prefetch = 0 : i64, scratch_operands = 0 : i64, tpu.core_type = #tpu.core_type<tc>, window_params = [{transform_indices = @transform_0, window_bounds = array<i64: 1, 3, 256>}, {transform_indices = @transform_1, window_bounds = array<i64: 1, 3, 256>}, {pipeline_mode = #tpu.pipeline_mode<synchronous>, transform_indices = @transform_2, window_bounds = array<i64: 3, 3>}, {pipeline_mode = #tpu.pipeline_mode<synchronous>, transform_indices = @transform_3, window_bounds = array<i64: 3, 3>}, {pipeline_mode = #tpu.pipeline_mode<synchronous>, transform_indices = @transform_4, window_bounds = array<i64: 3, 1>}, {transform_indices = @transform_5, window_bounds = array<i64: 1, 3, 256>}]} {
    %c0 = arith.constant 0 : index
    %c0_0 = arith.constant 0 : index
    %0 = vector.load %arg6[%c0, %c0_0] : memref<3x1xf32, #tpu.memory_space<vmem>>, vector<3x1xf32>
    %1 = vector.shape_cast %0 : vector<3x1xf32> to vector<3x1xf32>
    %2 = vector.broadcast %1 : vector<3x1xf32> to vector<3x256xf32>
    %c0_1 = arith.constant 0 : index
    %c0_2 = arith.constant 0 : index
    %c0_3 = arith.constant 0 : index
    %3 = vector.load %arg2[%c0_1, %c0_2, %c0_3] : memref<1x3x256xf32, #tpu.memory_space<vmem>>, vector<1x3x256xf32>
    %4 = vector.shape_cast %3 : vector<1x3x256xf32> to vector<3x256xf32>
    %c0_4 = arith.constant 0 : index
    %c0_5 = arith.constant 0 : index
    %5 = vector.load %arg4[%c0_4, %c0_5] : memref<3x3xf32, #tpu.memory_space<vmem>>, vector<3x3xf32>
    %6 = vector.extract_strided_slice %5 {offsets = [0, 0], sizes = [3, 1], strides = [1, 1]} : vector<3x3xf32> to vector<3x1xf32>
    %7 = vector.extract_strided_slice %4 {offsets = [0, 0], sizes = [1, 256], strides = [1, 1]} : vector<3x256xf32> to vector<1x256xf32>
    %8 = vector.broadcast %6 : vector<3x1xf32> to vector<3x256xf32>
    %9 = vector.broadcast %7 : vector<1x256xf32> to vector<3x256xf32>
    %10 = arith.mulf %8, %9 : vector<3x256xf32>
    %11 = arith.addf %2, %10 : vector<3x256xf32>
    %12 = vector.extract_strided_slice %5 {offsets = [0, 1], sizes = [3, 1], strides = [1, 1]} : vector<3x3xf32> to vector<3x1xf32>
    %13 = vector.extract_strided_slice %4 {offsets = [1, 0], sizes = [1, 256], strides = [1, 1]} : vector<3x256xf32> to vector<1x256xf32>
    %14 = vector.broadcast %12 : vector<3x1xf32> to vector<3x256xf32>
    %15 = vector.broadcast %13 : vector<1x256xf32> to vector<3x256xf32>
    %16 = arith.mulf %14, %15 : vector<3x256xf32>
    %17 = arith.addf %11, %16 : vector<3x256xf32>
    %18 = vector.extract_strided_slice %5 {offsets = [0, 2], sizes = [3, 1], strides = [1, 1]} : vector<3x3xf32> to vector<3x1xf32>
    %19 = vector.extract_strided_slice %4 {offsets = [2, 0], sizes = [1, 256], strides = [1, 1]} : vector<3x256xf32> to vector<1x256xf32>
    %20 = vector.broadcast %18 : vector<3x1xf32> to vector<3x256xf32>
    %21 = vector.broadcast %19 : vector<1x256xf32> to vector<3x256xf32>
    %22 = arith.mulf %20, %21 : vector<3x256xf32>
    %23 = arith.addf %17, %22 : vector<3x256xf32>
    %c0_6 = arith.constant 0 : index
    %c0_7 = arith.constant 0 : index
    %c0_8 = arith.constant 0 : index
    %24 = vector.load %arg3[%c0_6, %c0_7, %c0_8] : memref<1x3x256xf32, #tpu.memory_space<vmem>>, vector<1x3x256xf32>
    %25 = vector.shape_cast %24 : vector<1x3x256xf32> to vector<3x256xf32>
    %c0_9 = arith.constant 0 : index
    %c0_10 = arith.constant 0 : index
    %26 = vector.load %arg5[%c0_9, %c0_10] : memref<3x3xf32, #tpu.memory_space<vmem>>, vector<3x3xf32>
    %27 = vector.extract_strided_slice %26 {offsets = [0, 0], sizes = [3, 1], strides = [1, 1]} : vector<3x3xf32> to vector<3x1xf32>
    %28 = vector.extract_strided_slice %25 {offsets = [0, 0], sizes = [1, 256], strides = [1, 1]} : vector<3x256xf32> to vector<1x256xf32>
    %29 = vector.broadcast %27 : vector<3x1xf32> to vector<3x256xf32>
    %30 = vector.broadcast %28 : vector<1x256xf32> to vector<3x256xf32>
    %31 = arith.mulf %29, %30 : vector<3x256xf32>
    %32 = arith.addf %23, %31 : vector<3x256xf32>
    %33 = vector.extract_strided_slice %26 {offsets = [0, 1], sizes = [3, 1], strides = [1, 1]} : vector<3x3xf32> to vector<3x1xf32>
    %34 = vector.extract_strided_slice %25 {offsets = [1, 0], sizes = [1, 256], strides = [1, 1]} : vector<3x256xf32> to vector<1x256xf32>
    %35 = vector.broadcast %33 : vector<3x1xf32> to vector<3x256xf32>
    %36 = vector.broadcast %34 : vector<1x256xf32> to vector<3x256xf32>
    %37 = arith.mulf %35, %36 : vector<3x256xf32>
    %38 = arith.addf %32, %37 : vector<3x256xf32>
    %39 = vector.extract_strided_slice %26 {offsets = [0, 2], sizes = [3, 1], strides = [1, 1]} : vector<3x3xf32> to vector<3x1xf32>
    %40 = vector.extract_strided_slice %25 {offsets = [2, 0], sizes = [1, 256], strides = [1, 1]} : vector<3x256xf32> to vector<1x256xf32>
    %41 = vector.broadcast %39 : vector<3x1xf32> to vector<3x256xf32>
    %42 = vector.broadcast %40 : vector<1x256xf32> to vector<3x256xf32>
    %43 = arith.mulf %41, %42 : vector<3x256xf32>
    %44 = arith.addf %38, %43 : vector<3x256xf32>
    %cst = arith.constant 9.99999997E-7 : f32
    %cst_11 = arith.constant 1.000000e+06 : f32
    %45 = vector.broadcast %cst : f32 to vector<3x256xf32>
    %46 = arith.maximumf %45, %44 : vector<3x256xf32>
    %47 = vector.broadcast %cst_11 : f32 to vector<3x256xf32>
    %48 = arith.minimumf %47, %46 : vector<3x256xf32>
    %cst_12 = arith.constant dense<0xFF800000> : vector<256xf32>
    %49 = vector.multi_reduction <maximumf>, %48, %cst_12 [0] : vector<3x256xf32> to vector<256xf32>
    %50 = vector.shape_cast %49 : vector<256xf32> to vector<1x256xf32>
    %51 = vector.broadcast %50 : vector<1x256xf32> to vector<3x256xf32>
    %52 = arith.subf %48, %51 : vector<3x256xf32>
    %53 = math.exp %52 : vector<3x256xf32>
    %cst_13 = arith.constant dense<0.000000e+00> : vector<256xf32>
    %54 = vector.multi_reduction <add>, %53, %cst_13 [0] : vector<3x256xf32> to vector<256xf32>
    %55 = vector.shape_cast %54 : vector<256xf32> to vector<1x256xf32>
    %56 = math.log %55 : vector<1x256xf32>
    %57 = arith.addf %50, %56 : vector<1x256xf32>
    %58 = vector.broadcast %57 : vector<1x256xf32> to vector<3x256xf32>
    %59 = arith.subf %48, %58 : vector<3x256xf32>
    %60 = math.absf %59 : vector<3x256xf32>
    %c0_14 = arith.constant 0 : index
    %c0_15 = arith.constant 0 : index
    %c0_16 = arith.constant 0 : index
    %61 = vector.load %arg7[%c0_14, %c0_15, %c0_16] : memref<1x3x256xf32, #tpu.memory_space<vmem>>, vector<1x3x256xf32>
    %62 = vector.shape_cast %61 : vector<1x3x256xf32> to vector<3x256xf32>
    %63 = vector.shape_cast %60 : vector<3x256xf32> to vector<1x3x256xf32>
    tpu.vector_store %arg7[%c0_14, %c0_15, %c0_16], %63 {strides = array<i32>} : memref<1x3x256xf32, #tpu.memory_space<vmem>>, vector<1x3x256xf32>,
    return
  }
  func.func @transform_0(%arg0: i32, %arg1: i32) -> (i32, i32, i32) {
    %c0_i32 = arith.constant 0 : i32
    %c0_i32_0 = arith.constant 0 : i32
    return %arg0, %c0_i32, %arg1 : i32, i32, i32
  }
  func.func @transform_1(%arg0: i32, %arg1: i32) -> (i32, i32, i32) {
    %c0_i32 = arith.constant 0 : i32
    %c0_i32_0 = arith.constant 0 : i32
    return %arg0, %c0_i32, %arg1 : i32, i32, i32
  }
  func.func @transform_2(%arg0: i32, %arg1: i32) -> (i32, i32) {
    %c0_i32 = arith.constant 0 : i32
    %c0_i32_0 = arith.constant 0 : i32
    %c0_i32_1 = arith.constant 0 : i32
    return %c0_i32, %c0_i32_0 : i32, i32
  }
  func.func @transform_3(%arg0: i32, %arg1: i32) -> (i32, i32) {
    %c0_i32 = arith.constant 0 : i32
    %c0_i32_0 = arith.constant 0 : i32
    %c0_i32_1 = arith.constant 0 : i32
    return %c0_i32, %c0_i32_0 : i32, i32
  }
  func.func @transform_4(%arg0: i32, %arg1: i32) -> (i32, i32) {
    %c0_i32 = arith.constant 0 : i32
    %c0_i32_0 = arith.constant 0 : i32
    %c0_i32_1 = arith.constant 0 : i32
    return %c0_i32, %c0_i32_0 : i32, i32
  }
  func.func @transform_5(%arg0: i32, %arg1: i32) -> (i32, i32, i32) {
    %c0_i32 = arith.constant 0 : i32
    %c0_i32_0 = arith.constant 0 : i32
    return %arg0, %c0_i32, %arg1 : i32, i32, i32
  }
}

</mosaic_0001>

<llo_original>
// kernel: object_mask_forward.4
$region0: #{object_mask_forward.4}
  #allocation0 [shape = 'u32[]', space=smem, size = 0x4, offset = 0x4, fixed_abs, tag = 'smem constant byte address 0x4 - core index']
  #allocation1 [shape = 'u32[144,128]{1,0:T(1,128)}', space=vmem, size = 0x12000, scoped, tag = 'internal scratch']
  %s0 = inlined_call_operand.vmem [shape: f32[2,6,64], index: 0, kind: input, shape index: {}]
  %s1 = inlined_call_operand.vmem [shape: f32[6,1], index: 1, kind: input, shape index: {}]
  %s2 = inlined_call_operand.vmem [shape: f32[3,6], index: 2, kind: input, shape index: {}]
  %s3 = inlined_call_operand.vmem [shape: f32[3,1], index: 3, kind: input, shape index: {}]
  %s4 = inlined_call_operand.vmem [shape: f32[2,3,64], index: 4, kind: output, shape index: {}]
  %s5 = sld [smem:[#allocation0]]
  $region49: #{object_mask_forward.4} parent=0
    _
  %s7 = ssub.s32 1, %s5
  %s8 = scalar_select 0, %s7, %s5
  loop: start=0, step=1, limit=4
  $region2: #{object_mask_forward.4} parent=0 // loop_pre_header
    _
  $region3: #{object_mask_forward.4} parent=0 // loop_header
    %s10 = sphi 0, %s14
    %p11 = scmp.ge.s32.totalorder %s10, 4
    %s17 = sphi 0, %s29
    %s18 = sphi 0, %s25
    %s19 = sphi 0, %s17
    %s20 = sphi 0, %s18
    %s21 = sphi 0, %s19
    %s22 = sphi 0, %s20
    %s34 = sphi 0, %s36
    %s37 = sphi 0, %s34
    %s38 = sphi 0, %s37
    %s54 = sphi 0, %s38
    %s58 = sphi 0, %s58
    %s60 = sphi 0, %s58
    %s61 = sphi 0, %s60
    %s75 = sphi 0, %s61
    %s79 = sphi 0, %s79
    %s81 = sphi 0, %s79
    %s82 = sphi 0, %s81
    %s96 = sphi 0, %s82
    %s100 = sphi 0, %s100
    %s102 = sphi 0, %s100
    %s103 = sphi 0, %s102
    %s117 = sphi 0, %s103
    %s125 = sphi 0, %s127
    %s128 = sphi 0, %s125
    %s129 = sphi 0, %s128
    %s145 = sphi 0, %s129
  $region4: #{object_mask_forward.4} parent=0 // loop_header_branch
    %13 = sbr.rel (%p11) target = $region8
  $region5: #{object_mask_forward.4} parent=0 // loop_body
    %s15 = ssub.s32 %s10, 1
    %s16 = ssub.s32 %s10, 2
    %s23 = sadd.s32 1, %s18
    %p24 = scmp.ge.s32.totalorder %s23, 1
    %s25 = scalar_select %p24, 0, %s23
    %s26 = sadd.s32 1, %s17
    %s27 = scalar_select %p24, %s26, %s17
    %p28 = scmp.ge.s32.totalorder %s27, 2
    %s29 = scalar_select %p28, 0, %s27
    %s30 = ssub.s32 %s17, %s29
    %s31 = ssub.s32 %s18, %s25
    %s32 = sor.u32 %s30, %s31
    %p33 = scmp.eq.s32.totalorder %s32, 0
    %s35 = sadd.s32 %s34, 1
    %s36 = scalar_select %p33, %s34, %s35
    %p39 = pneg %p33
    %p40 = scmp.eq.s32.totalorder %s10, 1
    %p41 = por %p39, %p40
    %p42 = scmp.ne.s32.totalorder %s34, %s37
    %p43 = scmp.eq.s32.totalorder %s10, 0
    %p44 = por %p42, %p43
    %p45 = scmp.ne.s32.totalorder %s34, %s37
    %p46 = scmp.eq.s32.totalorder %s15, 1
    %p47 = por %p45, %p46
    %p48 = scmp.ne.s32.totalorder %s37, %s38
    %p49 = scmp.eq.s32.totalorder %s15, 0
    %p50 = por %p48, %p49
    %p51 = scmp.ne.s32.totalorder %s37, %s38
    %p52 = scmp.eq.s32.totalorder %s16, 1
    %p53 = por %p51, %p52
    %p55 = scmp.ne.s32.totalorder %s38, %s54
    %p56 = scmp.eq.s32.totalorder %s16, 0
    %p57 = por %p55, %p56
    %s59 = sadd.s32 %s58, 1
    %p62 = scmp.eq.s32.totalorder %s10, 1
    %p63 = scmp.ne.s32.totalorder %s58, %s60
    %p64 = scmp.eq.s32.totalorder %s10, 0
    %p65 = por %p63, %p64
    %p66 = scmp.ne.s32.totalorder %s58, %s60
    %p67 = scmp.eq.s32.totalorder %s15, 1
    %p68 = por %p66, %p67
    %p69 = scmp.ne.s32.totalorder %s60, %s61
    %p70 = scmp.eq.s32.totalorder %s15, 0
    %p71 = por %p69, %p70
    %p72 = scmp.ne.s32.totalorder %s60, %s61
    %p73 = scmp.eq.s32.totalorder %s16, 1
    %p74 = por %p72, %p73
    %p76 = scmp.ne.s32.totalorder %s61, %s75
    %p77 = scmp.eq.s32.totalorder %s16, 0
    %p78 = por %p76, %p77
    %s80 = sadd.s32 %s79, 1
    %p83 = scmp.eq.s32.totalorder %s10, 1
    %p84 = scmp.ne.s32.totalorder %s79, %s81
    %p85 = scmp.eq.s32.totalorder %s10, 0
    %p86 = por %p84, %p85
    %p87 = scmp.ne.s32.totalorder %s79, %s81
    %p88 = scmp.eq.s32.totalorder %s15, 1
    %p89 = por %p87, %p88
    %p90 = scmp.ne.s32.totalorder %s81, %s82
    %p91 = scmp.eq.s32.totalorder %s15, 0
    %p92 = por %p90, %p91
    %p93 = scmp.ne.s32.totalorder %s81, %s82
    %p94 = scmp.eq.s32.totalorder %s16, 1
    %p95 = por %p93, %p94
    %p97 = scmp.ne.s32.totalorder %s82, %s96
    %p98 = scmp.eq.s32.totalorder %s16, 0
    %p99 = por %p97, %p98
    %s101 = sadd.s32 %s100, 1
    %p104 = scmp.eq.s32.totalorder %s10, 1
    %p105 = scmp.ne.s32.totalorder %s100, %s102
    %p106 = scmp.eq.s32.totalorder %s10, 0
    %p107 = por %p105, %p106
    %p108 = scmp.ne.s32.totalorder %s100, %s102
    %p109 = scmp.eq.s32.totalorder %s15, 1
    %p110 = por %p108, %p109
    %p111 = scmp.ne.s32.totalorder %s102, %s103
    %p112 = scmp.eq.s32.totalorder %s15, 0
    %p113 = por %p111, %p112
    %p114 = scmp.ne.s32.totalorder %s102, %s103
    %p115 = scmp.eq.s32.totalorder %s16, 1
    %p116 = por %p114, %p115
    %p118 = scmp.ne.s32.totalorder %s103, %s117
    %p119 = scmp.eq.s32.totalorder %s16, 0
    %p120 = por %p118, %p119
    %s121 = ssub.s32 %s17, %s29
    %s122 = ssub.s32 %s18, %s25
    %s123 = sor.u32 %s121, %s122
    %p124 = scmp.eq.s32.totalorder %s123, 0
    %s126 = sadd.s32 %s125, 1
    %s127 = scalar_select %p124, %s125, %s126
    %p130 = pneg %p124
    %p131 = scmp.eq.s32.totalorder %s10, 1
    %p132 = por %p130, %p131
    %p133 = scmp.ne.s32.totalorder %s125, %s128
    %p134 = scmp.eq.s32.totalorder %s10, 0
    %p135 = por %p133, %p134
    %p136 = scmp.ne.s32.totalorder %s125, %s128
    %p137 = scmp.eq.s32.totalorder %s15, 1
    %p138 = por %p136, %p137
    %p139 = scmp.ne.s32.totalorder %s128, %s129
    %p140 = scmp.eq.s32.totalorder %s15, 0
    %p141 = por %p139, %p140
    %p142 = scmp.ne.s32.totalorder %s128, %s129
    %p143 = scmp.eq.s32.totalorder %s16, 1
    %p144 = por %p142, %p143
    %p146 = scmp.ne.s32.totalorder %s129, %s145
    %p147 = scmp.eq.s32.totalorder %s16, 0
    %p148 = por %p146, %p147
    %p149 = scmp.le.s32.totalorder 1, %s10
    %p150 = scmp.lt.s32.totalorder %s10, 3
    %p151 = pnand %p149, %p150
    %p152 = pneg %p151
    // Predicated region
    $region9: #{object_mask_forward.4} parent=5 // pred_check
      _
    $region10: #{object_mask_forward.4} parent=5 // pred_check_branch
      %154 = sbr.rel (%p151) target = $region12
    $region11: #{object_mask_forward.4} parent=5 // pred_region
      %s155 = ssub.s32 %s10, 1
      // Predicated region
      $region13: #{object_mask_forward.4} parent=11 // pred_check
        %p156 = pneg %p71
      $region14: #{object_mask_forward.4} parent=11 // pred_check_branch
        %158 = sbr.rel (%p156) target = $region16
      $region15: #{object_mask_forward.4} parent=11 // pred_region
        _
      $region16: #{object_mask_forward.4} parent=11 // pred_fallthru
        _
      // Predicated region
      $region17: #{object_mask_forward.4} parent=11 // pred_check
        %p159 = pneg %p92
      $region18: #{object_mask_forward.4} parent=11 // pred_check_branch
        %161 = sbr.rel (%p159) target = $region20
      $region19: #{object_mask_forward.4} parent=11 // pred_region
        _
      $region20: #{object_mask_forward.4} parent=11 // pred_fallthru
        _
      // Predicated region
      $region21: #{object_mask_forward.4} parent=11 // pred_check
        %p162 = pneg %p113
      $region22: #{object_mask_forward.4} parent=11 // pred_check_branch
        %164 = sbr.rel (%p162) target = $region24
      $region23: #{object_mask_forward.4} parent=11 // pred_region
        _
      $region24: #{object_mask_forward.4} parent=11 // pred_fallthru
        _
    $region12: #{object_mask_forward.4} parent=5 // pred_fallthru
      _
    %p165 = scmp.lt.s32.totalorder %s10, 2
    // Predicated region
    $region25: #{object_mask_forward.4} parent=5 // pred_check
      %p166 = pneg %p165
    $region26: #{object_mask_forward.4} parent=5 // pred_check_branch
      %168 = sbr.rel (%p166) target = $region28
    $region27: #{object_mask_forward.4} parent=5 // pred_region
      // Predicated region
      $region29: #{object_mask_forward.4} parent=27 // pred_check
        %p169 = pneg %p44
      $region30: #{object_mask_forward.4} parent=27 // pred_check_branch
        %171 = sbr.rel (%p169) target = $region32
      $region31: #{object_mask_forward.4} parent=27 // pred_region
        %p172 = scmp.lt.s32.totalorder %s17, 1
        %s173 = scalar_select %p172, %s17, 1
        %p174 = scmp.lt.s32.totalorder %s18, 0
        %s175 = scalar_select %p174, %s18, 0
        %s176 = sadd.s32 %s175, %s173
        %s177 = smul.addr %s176, 8
        %s178 = scalar_lea.vmem %s0, %s177
      $region32: #{object_mask_forward.4} parent=27 // pred_fallthru
        _
    $region28: #{object_mask_forward.4} parent=5 // pred_fallthru
      _
    %p179 = scmp.le.s32.totalorder 1, %s10
    %p180 = scmp.lt.s32.totalorder %s10, 3
    %p181 = pnand %p179, %p180
    %p182 = pneg %p181
    // Predicated region
    $region33: #{object_mask_forward.4} parent=5 // pred_check
      _
    $region34: #{object_mask_forward.4} parent=5 // pred_check_branch
      %184 = sbr.rel (%p181) target = $region36
    $region35: #{object_mask_forward.4} parent=5 // pred_region
      %s185 = ssub.s32 %s10, 1
      %p186 = scmp.lt.s32.totalorder %s19, 1
      %s187 = scalar_select %p186, %s19, 1
      %p188 = scmp.lt.s32.totalorder %s20, 0
      %s189 = scalar_select %p188, %s20, 0
      %s190 = sadd.s32 %s189, %s187
      %s191 = smul.addr %s190, 8
      %s192 = scalar_lea.vmem %s0, %s191
      %p193 = pneg %p50
      %p194 = pneg %p47
      %p195 = pneg %p71
      %p196 = pneg %p68
      %p197 = pneg %p92
      %p198 = pneg %p89
      %p199 = pneg %p113
      %p200 = pneg %p110
      %p201 = pneg %p141
      %p202 = pneg %p138
      %p203 = scmp.lt.s32.totalorder %s19, 1
      %s204 = scalar_select %p203, %s19, 1
      %p205 = scmp.lt.s32.totalorder %s20, 0
      %s206 = scalar_select %p205, %s20, 0
      %s207 = sadd.s32 %s206, %s204
      %s208 = smul.addr %s207, 4
      %s209 = scalar_lea.vmem %s4, %s208
      %p210 = scmp.lt.s32.totalorder %s19, 1
      %s211 = scalar_select %p210, %s19, 1
      %p212 = scmp.lt.s32.totalorder %s20, 0
      %s213 = scalar_select %p212, %s20, 0
      %s214 = sadd.s32 %s213, %s211
      %s215 = smul.addr %s214, 8
      %s216 = scalar_lea.vmem %s0, %s215
      %p217 = scmp.lt.s32.totalorder %s19, 1
      %s218 = scalar_select %p217, %s19, 1
      %p219 = scmp.lt.s32.totalorder %s20, 0
      %s220 = scalar_select %p219, %s20, 0
      %s221 = sadd.s32 %s220, %s218
      %s222 = smul.addr %s221, 4
      %s223 = scalar_lea.vmem %s4, %s222
      %v224 = vld [vmem:[%s216] sm:$0x3f]
      %vm225 = vcmask 521216
      %v226 = vsel %vm225, %v224, 0.0
      %v227 = vrot.slane %v226, 4
      %v228 = vadd.f32 %v226, %v227
      %v229 = vrot.slane %v228, 2
      %v230 = vadd.f32 %v228, %v229
      %v231 = vrot.slane %v230, 1
      %v232 = vadd.f32 %v230, %v231
      %v233 = vld [vmem:[%s1] sm:$0x3f]
      %235 = vset.pattern.permute.xlu0 0
      %236 = vperm.xlu0 %235, %v233
      %v237 = vpop.permute.xlu0 %236
      %v239 = vmul.f32 %v237, %v232
      %v240 = vsel %vm225, %v239, -inf
      %v241 = vrot.slane %v240, 4
      %v242 = vmax.f32 %v240, %v241
      %v243 = vrot.slane %v242, 2
      %v244 = vmax.f32 %v242, %v243
      %v245 = vrot.slane %v244, 1
      %v246 = vmax.f32 %v244, %v245
      %v247 = vsub.f32 %v239, %v246
      %v248 = vmul.f32 %v247, 1.442695
      %v249 = vpow.pop %v248
      %v250 = vsel %vm225, %v249, 0.0
      %v251 = vrot.slane %v250, 4
      %v252 = vadd.f32 %v250, %v251
      %v253 = vrot.slane %v252, 2
      %v254 = vadd.f32 %v252, %v253
      %v255 = vrot.slane %v254, 1
      %v256 = vadd.f32 %v254, %v255
      %v257 = vrcp.pop %v256
      %v258 = vmul.f32 1.0, %v257
      %v259 = vld [vmem:[%s2] sm:$0x7]
      %261 = vset.pattern.permute.xlu0 0
      %262 = vperm.xlu0 %261, %v259
      %v263 = vpop.permute.xlu0 %262
      %v265 = vlaneseq
      %v266 = vshrl.u32 %v265, 7
      %v267 = vsub.s32 0, %v266
      %v268 = vrot.slane %v249, %v267
      %v269 = vmul.f32 %v263, %v268
      %270 = vset.pattern.permute.xlu0 1
      %271 = vperm.xlu0 %270, %v259
      %v272 = vpop.permute.xlu0 %271
      %v274 = vlaneseq
      %v275 = vshrl.u32 %v274, 7
      %v276 = vsub.s32 1, %v275
      %v277 = vrot.slane %v249, %v276
      %v278 = vmul.f32 %v272, %v277
      %v279 = vadd.f32 %v269, %v278
      %280 = vset.pattern.permute.xlu0 2
      %281 = vperm.xlu0 %280, %v259
      %v282 = vpop.permute.xlu0 %281
      %v284 = vlaneseq
      %v285 = vshrl.u32 %v284, 7
      %v286 = vsub.s32 2, %v285
      %v287 = vrot.slane %v249, %v286
      %v288 = vmul.f32 %v282, %v287
      %v289 = vadd.f32 %v279, %v288
      %290 = vset.pattern.permute.xlu0 3
      %291 = vperm.xlu0 %290, %v259
      %v292 = vpop.permute.xlu0 %291
      %v294 = vlaneseq
      %v295 = vshrl.u32 %v294, 7
      %v296 = vsub.s32 3, %v295
      %v297 = vrot.slane %v249, %v296
      %v298 = vmul.f32 %v292, %v297
      %v299 = vadd.f32 %v289, %v298
      %300 = vset.pattern.permute.xlu0 4
      %301 = vperm.xlu0 %300, %v259
      %v302 = vpop.permute.xlu0 %301
      %v304 = vlaneseq
      %v305 = vshrl.u32 %v304, 7
      %v306 = vsub.s32 4, %v305
      %v307 = vrot.slane %v249, %v306
      %v308 = vmul.f32 %v302, %v307
      %v309 = vadd.f32 %v299, %v308
      %310 = vset.pattern.permute.xlu0 5
      %311 = vperm.xlu0 %310, %v259
      %v312 = vpop.permute.xlu0 %311
      %v314 = vlaneseq
      %v315 = vshrl.u32 %v314, 7
      %v316 = vsub.s32 5, %v315
      %v317 = vrot.slane %v249, %v316
      %v318 = vmul.f32 %v312, %v317
      %v319 = vadd.f32 %v309, %v318
      %v320 = vmul.f32 %v319, %v258
      %v321 = vld [vmem:[%s3] sm:$0x7]
      %323 = vset.pattern.permute.xlu0 0
      %324 = vperm.xlu0 %323, %v321
      %v325 = vpop.permute.xlu0 %324
      %v327 = vadd.f32 %v320, %v325
      %v328 = vmax.f32 %v327, 0.0
      %vm329 = vcmask 518144
      %330 = vst.msk [vmem:[%s223] sm:$0x7] %vm329, %v328
      %p331 = scmp.lt.s32.totalorder %s19, 1
      %s332 = scalar_select %p331, %s19, 1
      %p333 = scmp.lt.s32.totalorder %s20, 0
      %s334 = scalar_select %p333, %s20, 0
      %s335 = sadd.s32 %s334, %s332
      %s336 = smul.addr %s335, 4
      %s337 = scalar_lea.vmem %s4, %s336
      // Predicated region
      $region37: #{object_mask_forward.4} parent=35 // pred_check
        %p338 = pneg %p138
      $region38: #{object_mask_forward.4} parent=35 // pred_check_branch
        %340 = sbr.rel (%p338) target = $region40
      $region39: #{object_mask_forward.4} parent=35 // pred_region
        _
      $region40: #{object_mask_forward.4} parent=35 // pred_fallthru
        _
    $region36: #{object_mask_forward.4} parent=5 // pred_fallthru
      _
    %p341 = scmp.le.s32.totalorder 2, %s10
    // Predicated region
    $region41: #{object_mask_forward.4} parent=5 // pred_check
      %p342 = pneg %p341
    $region42: #{object_mask_forward.4} parent=5 // pred_check_branch
      %344 = sbr.rel (%p342) target = $region44
    $region43: #{object_mask_forward.4} parent=5 // pred_region
      %s345 = ssub.s32 %s10, 2
      // Predicated region
      $region45: #{object_mask_forward.4} parent=43 // pred_check
        %p346 = pneg %p144
      $region46: #{object_mask_forward.4} parent=43 // pred_check_branch
        %348 = sbr.rel (%p346) target = $region48
      $region47: #{object_mask_forward.4} parent=43 // pred_region
        %p349 = scmp.lt.s32.totalorder %s21, 1
        %s350 = scalar_select %p349, %s21, 1
        %p351 = scmp.lt.s32.totalorder %s22, 0
        %s352 = scalar_select %p351, %s22, 0
        %s353 = sadd.s32 %s352, %s350
        %s354 = smul.addr %s353, 4
        %s355 = scalar_lea.vmem %s4, %s354
      $region48: #{object_mask_forward.4} parent=43 // pred_fallthru
        _
    $region44: #{object_mask_forward.4} parent=5 // pred_fallthru
      _
  $region6: #{object_mask_forward.4} parent=0 // loop_footer
    %s14 = sadd.s32 1, %s10
  $region7: #{object_mask_forward.4} parent=0 // loop_footer_branch
    %9 = sbr.rel target = $region3
  $region8: #{object_mask_forward.4} parent=0 // loop_exit
    _

// kernel: object_mask_forward.3
$region0: #{object_mask_forward.3}
  #allocation0 [shape = 'u32[]', space=smem, size = 0x4, offset = 0x4, fixed_abs, tag = 'smem constant byte address 0x4 - core index']
  #allocation1 [shape = 'u32[144,128]{1,0:T(1,128)}', space=vmem, size = 0x12000, scoped, tag = 'internal scratch']
  %s0 = inlined_call_operand.vmem [shape: f32[2,8,256], index: 0, kind: input, shape index: {}]
  %s1 = inlined_call_operand.vmem [shape: f32[8,1], index: 1, kind: input, shape index: {}]
  %s2 = inlined_call_operand.vmem [shape: f32[3,8], index: 2, kind: input, shape index: {}]
  %s3 = inlined_call_operand.vmem [shape: f32[3,1], index: 3, kind: input, shape index: {}]
  %s4 = inlined_call_operand.vmem [shape: f32[2,3,256], index: 4, kind: output, shape index: {}]
  %s5 = sld [smem:[#allocation0]]
  $region49: #{object_mask_forward.3} parent=0
    _
  %s7 = ssub.s32 1, %s5
  %s8 = scalar_select 0, %s7, %s5
  loop: start=0, step=1, limit=4
  $region2: #{object_mask_forward.3} parent=0 // loop_pre_header
    _
  $region3: #{object_mask_forward.3} parent=0 // loop_header
    %s10 = sphi 0, %s14
    %p11 = scmp.ge.s32.totalorder %s10, 4
    %s17 = sphi 0, %s29
    %s18 = sphi 0, %s25
    %s19 = sphi 0, %s17
    %s20 = sphi 0, %s18
    %s21 = sphi 0, %s19
    %s22 = sphi 0, %s20
    %s34 = sphi 0, %s36
    %s37 = sphi 0, %s34
    %s38 = sphi 0, %s37
    %s54 = sphi 0, %s38
    %s58 = sphi 0, %s58
    %s60 = sphi 0, %s58
    %s61 = sphi 0, %s60
    %s75 = sphi 0, %s61
    %s79 = sphi 0, %s79
    %s81 = sphi 0, %s79
    %s82 = sphi 0, %s81
    %s96 = sphi 0, %s82
    %s100 = sphi 0, %s100
    %s102 = sphi 0, %s100
    %s103 = sphi 0, %s102
    %s117 = sphi 0, %s103
    %s125 = sphi 0, %s127
    %s128 = sphi 0, %s125
    %s129 = sphi 0, %s128
    %s145 = sphi 0, %s129
  $region4: #{object_mask_forward.3} parent=0 // loop_header_branch
    %13 = sbr.rel (%p11) target = $region8
  $region5: #{object_mask_forward.3} parent=0 // loop_body
    %s15 = ssub.s32 %s10, 1
    %s16 = ssub.s32 %s10, 2
    %s23 = sadd.s32 1, %s18
    %p24 = scmp.ge.s32.totalorder %s23, 1
    %s25 = scalar_select %p24, 0, %s23
    %s26 = sadd.s32 1, %s17
    %s27 = scalar_select %p24, %s26, %s17
    %p28 = scmp.ge.s32.totalorder %s27, 2
    %s29 = scalar_select %p28, 0, %s27
    %s30 = ssub.s32 %s17, %s29
    %s31 = ssub.s32 %s18, %s25
    %s32 = sor.u32 %s30, %s31
    %p33 = scmp.eq.s32.totalorder %s32, 0
    %s35 = sadd.s32 %s34, 1
    %s36 = scalar_select %p33, %s34, %s35
    %p39 = pneg %p33
    %p40 = scmp.eq.s32.totalorder %s10, 1
    %p41 = por %p39, %p40
    %p42 = scmp.ne.s32.totalorder %s34, %s37
    %p43 = scmp.eq.s32.totalorder %s10, 0
    %p44 = por %p42, %p43
    %p45 = scmp.ne.s32.totalorder %s34, %s37
    %p46 = scmp.eq.s32.totalorder %s15, 1
    %p47 = por %p45, %p46
    %p48 = scmp.ne.s32.totalorder %s37, %s38
    %p49 = scmp.eq.s32.totalorder %s15, 0
    %p50 = por %p48, %p49
    %p51 = scmp.ne.s32.totalorder %s37, %s38
    %p52 = scmp.eq.s32.totalorder %s16, 1
    %p53 = por %p51, %p52
    %p55 = scmp.ne.s32.totalorder %s38, %s54
    %p56 = scmp.eq.s32.totalorder %s16, 0
    %p57 = por %p55, %p56
    %s59 = sadd.s32 %s58, 1
    %p62 = scmp.eq.s32.totalorder %s10, 1
    %p63 = scmp.ne.s32.totalorder %s58, %s60
    %p64 = scmp.eq.s32.totalorder %s10, 0
    %p65 = por %p63, %p64
    %p66 = scmp.ne.s32.totalorder %s58, %s60
    %p67 = scmp.eq.s32.totalorder %s15, 1
    %p68 = por %p66, %p67
    %p69 = scmp.ne.s32.totalorder %s60, %s61
    %p70 = scmp.eq.s32.totalorder %s15, 0
    %p71 = por %p69, %p70
    %p72 = scmp.ne.s32.totalorder %s60, %s61
    %p73 = scmp.eq.s32.totalorder %s16, 1
    %p74 = por %p72, %p73
    %p76 = scmp.ne.s32.totalorder %s61, %s75
    %p77 = scmp.eq.s32.totalorder %s16, 0
    %p78 = por %p76, %p77
    %s80 = sadd.s32 %s79, 1
    %p83 = scmp.eq.s32.totalorder %s10, 1
    %p84 = scmp.ne.s32.totalorder %s79, %s81
    %p85 = scmp.eq.s32.totalorder %s10, 0
    %p86 = por %p84, %p85
    %p87 = scmp.ne.s32.totalorder %s79, %s81
    %p88 = scmp.eq.s32.totalorder %s15, 1
    %p89 = por %p87, %p88
    %p90 = scmp.ne.s32.totalorder %s81, %s82
    %p91 = scmp.eq.s32.totalorder %s15, 0
    %p92 = por %p90, %p91
    %p93 = scmp.ne.s32.totalorder %s81, %s82
    %p94 = scmp.eq.s32.totalorder %s16, 1
    %p95 = por %p93, %p94
    %p97 = scmp.ne.s32.totalorder %s82, %s96
    %p98 = scmp.eq.s32.totalorder %s16, 0
    %p99 = por %p97, %p98
    %s101 = sadd.s32 %s100, 1
    %p104 = scmp.eq.s32.totalorder %s10, 1
    %p105 = scmp.ne.s32.totalorder %s100, %s102
    %p106 = scmp.eq.s32.totalorder %s10, 0
    %p107 = por %p105, %p106
    %p108 = scmp.ne.s32.totalorder %s100, %s102
    %p109 = scmp.eq.s32.totalorder %s15, 1
    %p110 = por %p108, %p109
    %p111 = scmp.ne.s32.totalorder %s102, %s103
    %p112 = scmp.eq.s32.totalorder %s15, 0
    %p113 = por %p111, %p112
    %p114 = scmp.ne.s32.totalorder %s102, %s103
    %p115 = scmp.eq.s32.totalorder %s16, 1
    %p116 = por %p114, %p115
    %p118 = scmp.ne.s32.totalorder %s103, %s117
    %p119 = scmp.eq.s32.totalorder %s16, 0
    %p120 = por %p118, %p119
    %s121 = ssub.s32 %s17, %s29
    %s122 = ssub.s32 %s18, %s25
    %s123 = sor.u32 %s121, %s122
    %p124 = scmp.eq.s32.totalorder %s123, 0
    %s126 = sadd.s32 %s125, 1
    %s127 = scalar_select %p124, %s125, %s126
    %p130 = pneg %p124
    %p131 = scmp.eq.s32.totalorder %s10, 1
    %p132 = por %p130, %p131
    %p133 = scmp.ne.s32.totalorder %s125, %s128
    %p134 = scmp.eq.s32.totalorder %s10, 0
    %p135 = por %p133, %p134
    %p136 = scmp.ne.s32.totalorder %s125, %s128
    %p137 = scmp.eq.s32.totalorder %s15, 1
    %p138 = por %p136, %p137
    %p139 = scmp.ne.s32.totalorder %s128, %s129
    %p140 = scmp.eq.s32.totalorder %s15, 0
    %p141 = por %p139, %p140
    %p142 = scmp.ne.s32.totalorder %s128, %s129
    %p143 = scmp.eq.s32.totalorder %s16, 1
    %p144 = por %p142, %p143
    %p146 = scmp.ne.s32.totalorder %s129, %s145
    %p147 = scmp.eq.s32.totalorder %s16, 0
    %p148 = por %p146, %p147
    %p149 = scmp.le.s32.totalorder 1, %s10
    %p150 = scmp.lt.s32.totalorder %s10, 3
    %p151 = pnand %p149, %p150
    %p152 = pneg %p151
    // Predicated region
    $region9: #{object_mask_forward.3} parent=5 // pred_check
      _
    $region10: #{object_mask_forward.3} parent=5 // pred_check_branch
      %154 = sbr.rel (%p151) target = $region12
    $region11: #{object_mask_forward.3} parent=5 // pred_region
      %s155 = ssub.s32 %s10, 1
      // Predicated region
      $region13: #{object_mask_forward.3} parent=11 // pred_check
        %p156 = pneg %p71
      $region14: #{object_mask_forward.3} parent=11 // pred_check_branch
        %158 = sbr.rel (%p156) target = $region16
      $region15: #{object_mask_forward.3} parent=11 // pred_region
        _
      $region16: #{object_mask_forward.3} parent=11 // pred_fallthru
        _
      // Predicated region
      $region17: #{object_mask_forward.3} parent=11 // pred_check
        %p159 = pneg %p92
      $region18: #{object_mask_forward.3} parent=11 // pred_check_branch
        %161 = sbr.rel (%p159) target = $region20
      $region19: #{object_mask_forward.3} parent=11 // pred_region
        _
      $region20: #{object_mask_forward.3} parent=11 // pred_fallthru
        _
      // Predicated region
      $region21: #{object_mask_forward.3} parent=11 // pred_check
        %p162 = pneg %p113
      $region22: #{object_mask_forward.3} parent=11 // pred_check_branch
        %164 = sbr.rel (%p162) target = $region24
      $region23: #{object_mask_forward.3} parent=11 // pred_region
        _
      $region24: #{object_mask_forward.3} parent=11 // pred_fallthru
        _
    $region12: #{object_mask_forward.3} parent=5 // pred_fallthru
      _
    %p165 = scmp.lt.s32.totalorder %s10, 2
    // Predicated region
    $region25: #{object_mask_forward.3} parent=5 // pred_check
      %p166 = pneg %p165
    $region26: #{object_mask_forward.3} parent=5 // pred_check_branch
      %168 = sbr.rel (%p166) target = $region28
    $region27: #{object_mask_forward.3} parent=5 // pred_region
      // Predicated region
      $region29: #{object_mask_forward.3} parent=27 // pred_check
        %p169 = pneg %p44
      $region30: #{object_mask_forward.3} parent=27 // pred_check_branch
        %171 = sbr.rel (%p169) target = $region32
      $region31: #{object_mask_forward.3} parent=27 // pred_region
        %s172 = smul.u32 2, %s18
        %p173 = scmp.lt.s32.totalorder %s17, 1
        %s174 = scalar_select %p173, %s17, 1
        %p175 = scmp.lt.s32.totalorder %s172, 1
        %s176 = scalar_select %p175, %s172, 1
        %s177 = smul.addr %s174, 2
        %s178 = sadd.s32 %s176, %s177
        %s179 = smul.addr %s178, 8
        %s180 = scalar_lea.vmem %s0, %s179
        %s181 = smul.u32 2, %s18
      $region32: #{object_mask_forward.3} parent=27 // pred_fallthru
        _
    $region28: #{object_mask_forward.3} parent=5 // pred_fallthru
      _
    %p182 = scmp.le.s32.totalorder 1, %s10
    %p183 = scmp.lt.s32.totalorder %s10, 3
    %p184 = pnand %p182, %p183
    %p185 = pneg %p184
    // Predicated region
    $region33: #{object_mask_forward.3} parent=5 // pred_check
      _
    $region34: #{object_mask_forward.3} parent=5 // pred_check_branch
      %187 = sbr.rel (%p184) target = $region36
    $region35: #{object_mask_forward.3} parent=5 // pred_region
      %s188 = ssub.s32 %s10, 1
      %s189 = smul.u32 2, %s20
      %p190 = scmp.lt.s32.totalorder %s19, 1
      %s191 = scalar_select %p190, %s19, 1
      %p192 = scmp.lt.s32.totalorder %s189, 1
      %s193 = scalar_select %p192, %s189, 1
      %s194 = smul.addr %s191, 2
      %s195 = sadd.s32 %s193, %s194
      %s196 = smul.addr %s195, 8
      %s197 = scalar_lea.vmem %s0, %s196
      %p198 = pneg %p50
      %p199 = pneg %p47
      %p200 = pneg %p71
      %p201 = pneg %p68
      %p202 = pneg %p92
      %p203 = pneg %p89
      %p204 = pneg %p113
      %p205 = pneg %p110
      %p206 = pneg %p141
      %p207 = pneg %p138
      %s208 = smul.u32 2, %s20
      %p209 = scmp.lt.s32.totalorder %s19, 1
      %s210 = scalar_select %p209, %s19, 1
      %p211 = scmp.lt.s32.totalorder %s208, 1
      %s212 = scalar_select %p211, %s208, 1
      %s213 = smul.addr %s210, 2
      %s214 = sadd.s32 %s212, %s213
      %s215 = smul.addr %s214, 4
      %s216 = scalar_lea.vmem %s4, %s215
      %s217 = smul.u32 2, %s20
      %p218 = scmp.lt.s32.totalorder %s19, 1
      %s219 = scalar_select %p218, %s19, 1
      %p220 = scmp.lt.s32.totalorder %s217, 1
      %s221 = scalar_select %p220, %s217, 1
      %s222 = smul.addr %s219, 2
      %s223 = sadd.s32 %s221, %s222
      %s224 = smul.addr %s223, 8
      %s225 = scalar_lea.vmem %s0, %s224
      %s226 = smul.u32 2, %s20
      %s227 = smul.u32 2, %s20
      %p228 = scmp.lt.s32.totalorder %s19, 1
      %s229 = scalar_select %p228, %s19, 1
      %p230 = scmp.lt.s32.totalorder %s227, 1
      %s231 = scalar_select %p230, %s227, 1
      %s232 = smul.addr %s229, 2
      %s233 = sadd.s32 %s231, %s232
      %s234 = smul.addr %s233, 4
      %s235 = scalar_lea.vmem %s4, %s234
      %s236 = smul.u32 2, %s20
      %v237 = vld [vmem:[%s225] sm:$0xff]
      %v238 = vld [vmem:[%s225 + $0x8] sm:$0xff]
      %v239 = vrot.slane %v237, 4
      %v240 = vadd.f32 %v237, %v239
      %v241 = vrot.slane %v240, 2
      %v242 = vadd.f32 %v240, %v241
      %v243 = vrot.slane %v242, 1
      %v244 = vadd.f32 %v242, %v243
      %v245 = vrot.slane %v238, 4
      %v246 = vadd.f32 %v238, %v245
      %v247 = vrot.slane %v246, 2
      %v248 = vadd.f32 %v246, %v247
      %v249 = vrot.slane %v248, 1
      %v250 = vadd.f32 %v248, %v249
      %v251 = vld [vmem:[%s1] sm:$0xff]
      %253 = vset.pattern.permute.xlu0 0
      %254 = vperm.xlu0 %253, %v251
      %v255 = vpop.permute.xlu0 %254
      %v257 = vmul.f32 %v255, %v244
      %v258 = vmul.f32 %v255, %v250
      %v259 = vrot.slane %v257, 4
      %v260 = vmax.f32 %v257, %v259
      %v261 = vrot.slane %v260, 2
      %v262 = vmax.f32 %v260, %v261
      %v263 = vrot.slane %v262, 1
      %v264 = vmax.f32 %v262, %v263
      %v265 = vrot.slane %v258, 4
      %v266 = vmax.f32 %v258, %v265
      %v267 = vrot.slane %v266, 2
      %v268 = vmax.f32 %v266, %v267
      %v269 = vrot.slane %v268, 1
      %v270 = vmax.f32 %v268, %v269
      %v271 = vsub.f32 %v257, %v264
      %v272 = vsub.f32 %v258, %v270
      %v273 = vmul.f32 %v271, 1.442695
      %v274 = vpow.pop %v273
      %v275 = vmul.f32 %v272, 1.442695
      %v276 = vpow.pop %v275
      %v277 = vrot.slane %v274, 4
      %v278 = vadd.f32 %v274, %v277
      %v279 = vrot.slane %v278, 2
      %v280 = vadd.f32 %v278, %v279
      %v281 = vrot.slane %v280, 1
      %v282 = vadd.f32 %v280, %v281
      %v283 = vrot.slane %v276, 4
      %v284 = vadd.f32 %v276, %v283
      %v285 = vrot.slane %v284, 2
      %v286 = vadd.f32 %v284, %v285
      %v287 = vrot.slane %v286, 1
      %v288 = vadd.f32 %v286, %v287
      %v289 = vrcp.pop %v282
      %v290 = vmul.f32 1.0, %v289
      %v291 = vrcp.pop %v288
      %v292 = vmul.f32 1.0, %v291
      %v293 = vld [vmem:[%s2] sm:$0x7]
      %295 = vset.pattern.permute.xlu0 0
      %296 = vperm.xlu0 %295, %v293
      %v297 = vpop.permute.xlu0 %296
      %v299 = vlaneseq
      %v300 = vshrl.u32 %v299, 7
      %v301 = vsub.s32 0, %v300
      %v302 = vrot.slane %v274, %v301
      %v303 = vlaneseq
      %v304 = vshrl.u32 %v303, 7
      %v305 = vsub.s32 0, %v304
      %v306 = vrot.slane %v276, %v305
      %v307 = vmul.f32 %v297, %v302
      %v308 = vmul.f32 %v297, %v306
      %309 = vset.pattern.permute.xlu0 1
      %310 = vperm.xlu0 %309, %v293
      %v311 = vpop.permute.xlu0 %310
      %v313 = vlaneseq
      %v314 = vshrl.u32 %v313, 7
      %v315 = vsub.s32 1, %v314
      %v316 = vrot.slane %v274, %v315
      %v317 = vlaneseq
      %v318 = vshrl.u32 %v317, 7
      %v319 = vsub.s32 1, %v318
      %v320 = vrot.slane %v276, %v319
      %v321 = vmul.f32 %v311, %v316
      %v322 = vmul.f32 %v311, %v320
      %v323 = vadd.f32 %v307, %v321
      %v324 = vadd.f32 %v308, %v322
      %325 = vset.pattern.permute.xlu0 2
      %326 = vperm.xlu0 %325, %v293
      %v327 = vpop.permute.xlu0 %326
      %v329 = vlaneseq
      %v330 = vshrl.u32 %v329, 7
      %v331 = vsub.s32 2, %v330
      %v332 = vrot.slane %v274, %v331
      %v333 = vlaneseq
      %v334 = vshrl.u32 %v333, 7
      %v335 = vsub.s32 2, %v334
      %v336 = vrot.slane %v276, %v335
      %v337 = vmul.f32 %v327, %v332
      %v338 = vmul.f32 %v327, %v336
      %v339 = vadd.f32 %v323, %v337
      %v340 = vadd.f32 %v324, %v338
      %341 = vset.pattern.permute.xlu0 3
      %342 = vperm.xlu0 %341, %v293
      %v343 = vpop.permute.xlu0 %342
      %v345 = vlaneseq
      %v346 = vshrl.u32 %v345, 7
      %v347 = vsub.s32 3, %v346
      %v348 = vrot.slane %v274, %v347
      %v349 = vlaneseq
      %v350 = vshrl.u32 %v349, 7
      %v351 = vsub.s32 3, %v350
      %v352 = vrot.slane %v276, %v351
      %v353 = vmul.f32 %v343, %v348
      %v354 = vmul.f32 %v343, %v352
      %v355 = vadd.f32 %v339, %v353
      %v356 = vadd.f32 %v340, %v354
      %357 = vset.pattern.permute.xlu0 4
      %358 = vperm.xlu0 %357, %v293
      %v359 = vpop.permute.xlu0 %358
      %v361 = vlaneseq
      %v362 = vshrl.u32 %v361, 7
      %v363 = vsub.s32 4, %v362
      %v364 = vrot.slane %v274, %v363
      %v365 = vlaneseq
      %v366 = vshrl.u32 %v365, 7
      %v367 = vsub.s32 4, %v366
      %v368 = vrot.slane %v276, %v367
      %v369 = vmul.f32 %v359, %v364
      %v370 = vmul.f32 %v359, %v368
      %v371 = vadd.f32 %v355, %v369
      %v372 = vadd.f32 %v356, %v370
      %373 = vset.pattern.permute.xlu0 5
      %374 = vperm.xlu0 %373, %v293
      %v375 = vpop.permute.xlu0 %374
      %v377 = vlaneseq
      %v378 = vshrl.u32 %v377, 7
      %v379 = vsub.s32 5, %v378
      %v380 = vrot.slane %v274, %v379
      %v381 = vlaneseq
      %v382 = vshrl.u32 %v381, 7
      %v383 = vsub.s32 5, %v382
      %v384 = vrot.slane %v276, %v383
      %v385 = vmul.f32 %v375, %v380
      %v386 = vmul.f32 %v375, %v384
      %v387 = vadd.f32 %v371, %v385
      %v388 = vadd.f32 %v372, %v386
      %389 = vset.pattern.permute.xlu0 6
      %390 = vperm.xlu0 %389, %v293
      %v391 = vpop.permute.xlu0 %390
      %v393 = vlaneseq
      %v394 = vshrl.u32 %v393, 7
      %v395 = vsub.s32 6, %v394
      %v396 = vrot.slane %v274, %v395
      %v397 = vlaneseq
      %v398 = vshrl.u32 %v397, 7
      %v399 = vsub.s32 6, %v398
      %v400 = vrot.slane %v276, %v399
      %v401 = vmul.f32 %v391, %v396
      %v402 = vmul.f32 %v391, %v400
      %v403 = vadd.f32 %v387, %v401
      %v404 = vadd.f32 %v388, %v402
      %405 = vset.pattern.permute.xlu0 7
      %406 = vperm.xlu0 %405, %v293
      %v407 = vpop.permute.xlu0 %406
      %v409 = vlaneseq
      %v410 = vshrl.u32 %v409, 7
      %v411 = vsub.s32 7, %v410
      %v412 = vrot.slane %v274, %v411
      %v413 = vlaneseq
      %v414 = vshrl.u32 %v413, 7
      %v415 = vsub.s32 7, %v414
      %v416 = vrot.slane %v276, %v415
      %v417 = vmul.f32 %v407, %v412
      %v418 = vmul.f32 %v407, %v416
      %v419 = vadd.f32 %v403, %v417
      %v420 = vadd.f32 %v404, %v418
      %v421 = vmul.f32 %v419, %v290
      %v422 = vmul.f32 %v420, %v292
      %v423 = vld [vmem:[%s3] sm:$0x7]
      %425 = vset.pattern.permute.xlu0 0
      %426 = vperm.xlu0 %425, %v423
      %v427 = vpop.permute.xlu0 %426
      %v429 = vadd.f32 %v421, %v427
      %v430 = vadd.f32 %v422, %v427
      %v431 = vmax.f32 %v429, 0.0
      %v432 = vmax.f32 %v430, 0.0
      %v435 = vcombine.low %v431, %v432
      %437 = vst [vmem:[%s235] sm:$0x77] %v435
      %s438 = smul.u32 2, %s20
      %p439 = scmp.lt.s32.totalorder %s19, 1
      %s440 = scalar_select %p439, %s19, 1
      %p441 = scmp.lt.s32.totalorder %s438, 1
      %s442 = scalar_select %p441, %s438, 1
      %s443 = smul.addr %s440, 2
      %s444 = sadd.s32 %s442, %s443
      %s445 = smul.addr %s444, 4
      %s446 = scalar_lea.vmem %s4, %s445
      // Predicated region
      $region37: #{object_mask_forward.3} parent=35 // pred_check
        %p447 = pneg %p138
      $region38: #{object_mask_forward.3} parent=35 // pred_check_branch
        %449 = sbr.rel (%p447) target = $region40
      $region39: #{object_mask_forward.3} parent=35 // pred_region
        %s450 = smul.u32 2, %s20
      $region40: #{object_mask_forward.3} parent=35 // pred_fallthru
        _
    $region36: #{object_mask_forward.3} parent=5 // pred_fallthru
      _
    %p451 = scmp.le.s32.totalorder 2, %s10
    // Predicated region
    $region41: #{object_mask_forward.3} parent=5 // pred_check
      %p452 = pneg %p451
    $region42: #{object_mask_forward.3} parent=5 // pred_check_branch
      %454 = sbr.rel (%p452) target = $region44
    $region43: #{object_mask_forward.3} parent=5 // pred_region
      %s455 = ssub.s32 %s10, 2
      // Predicated region
      $region45: #{object_mask_forward.3} parent=43 // pred_check
        %p456 = pneg %p144
      $region46: #{object_mask_forward.3} parent=43 // pred_check_branch
        %458 = sbr.rel (%p456) target = $region48
      $region47: #{object_mask_forward.3} parent=43 // pred_region
        %s459 = smul.u32 2, %s22
        %p460 = scmp.lt.s32.totalorder %s21, 1
        %s461 = scalar_select %p460, %s21, 1
        %p462 = scmp.lt.s32.totalorder %s459, 1
        %s463 = scalar_select %p462, %s459, 1
        %s464 = smul.addr %s461, 2
        %s465 = sadd.s32 %s463, %s464
        %s466 = smul.addr %s465, 4
        %s467 = scalar_lea.vmem %s4, %s466
      $region48: #{object_mask_forward.3} parent=43 // pred_fallthru
        _
    $region44: #{object_mask_forward.3} parent=5 // pred_fallthru
      _
  $region6: #{object_mask_forward.3} parent=0 // loop_footer
    %s14 = sadd.s32 1, %s10
  $region7: #{object_mask_forward.3} parent=0 // loop_footer_branch
    %9 = sbr.rel target = $region3
  $region8: #{object_mask_forward.3} parent=0 // loop_exit
    _

// kernel: object_mask_forward.5
$region0: #{object_mask_forward.5}
  #allocation0 [shape = 'u32[]', space=smem, size = 0x4, offset = 0x4, fixed_abs, tag = 'smem constant byte address 0x4 - core index']
  #allocation1 [shape = 'u32[144,128]{1,0:T(1,128)}', space=vmem, size = 0x12000, scoped, tag = 'internal scratch']
  %s0 = inlined_call_operand.vmem [shape: f32[2,3,256], index: 0, kind: input, shape index: {}]
  %s1 = inlined_call_operand.vmem [shape: f32[2,3,256], index: 1, kind: input, shape index: {}]
  %s2 = inlined_call_operand.vmem [shape: f32[3,3], index: 2, kind: input, shape index: {}]
  %s3 = inlined_call_operand.vmem [shape: f32[3,3], index: 3, kind: input, shape index: {}]
  %s4 = inlined_call_operand.vmem [shape: f32[3,1], index: 4, kind: input, shape index: {}]
  %s5 = inlined_call_operand.vmem [shape: f32[2,3,256], index: 5, kind: output, shape index: {}]
  %s6 = sld [smem:[#allocation0]]
  $region53: #{object_mask_forward.5} parent=0
    _
  %s8 = ssub.s32 1, %s6
  %s9 = scalar_select 0, %s8, %s6
  loop: start=0, step=1, limit=4
  $region2: #{object_mask_forward.5} parent=0 // loop_pre_header
    _
  $region3: #{object_mask_forward.5} parent=0 // loop_header
    %s11 = sphi 0, %s15
    %p12 = scmp.ge.s32.totalorder %s11, 4
    %s18 = sphi 0, %s30
    %s19 = sphi 0, %s26
    %s20 = sphi 0, %s18
    %s21 = sphi 0, %s19
    %s22 = sphi 0, %s20
    %s23 = sphi 0, %s21
    %s35 = sphi 0, %s37
    %s38 = sphi 0, %s35
    %s39 = sphi 0, %s38
    %s55 = sphi 0, %s39
    %s63 = sphi 0, %s65
    %s66 = sphi 0, %s63
    %s67 = sphi 0, %s66
    %s83 = sphi 0, %s67
    %s87 = sphi 0, %s87
    %s89 = sphi 0, %s87
    %s90 = sphi 0, %s89
    %s104 = sphi 0, %s90
    %s108 = sphi 0, %s108
    %s110 = sphi 0, %s108
    %s111 = sphi 0, %s110
    %s125 = sphi 0, %s111
    %s129 = sphi 0, %s129
    %s131 = sphi 0, %s129
    %s132 = sphi 0, %s131
    %s146 = sphi 0, %s132
    %s154 = sphi 0, %s156
    %s157 = sphi 0, %s154
    %s158 = sphi 0, %s157
    %s174 = sphi 0, %s158
  $region4: #{object_mask_forward.5} parent=0 // loop_header_branch
    %14 = sbr.rel (%p12) target = $region8
  $region5: #{object_mask_forward.5} parent=0 // loop_body
    %s16 = ssub.s32 %s11, 1
    %s17 = ssub.s32 %s11, 2
    %s24 = sadd.s32 1, %s19
    %p25 = scmp.ge.s32.totalorder %s24, 1
    %s26 = scalar_select %p25, 0, %s24
    %s27 = sadd.s32 1, %s18
    %s28 = scalar_select %p25, %s27, %s18
    %p29 = scmp.ge.s32.totalorder %s28, 2
    %s30 = scalar_select %p29, 0, %s28
    %s31 = ssub.s32 %s18, %s30
    %s32 = ssub.s32 %s19, %s26
    %s33 = sor.u32 %s31, %s32
    %p34 = scmp.eq.s32.totalorder %s33, 0
    %s36 = sadd.s32 %s35, 1
    %s37 = scalar_select %p34, %s35, %s36
    %p40 = pneg %p34
    %p41 = scmp.eq.s32.totalorder %s11, 1
    %p42 = por %p40, %p41
    %p43 = scmp.ne.s32.totalorder %s35, %s38
    %p44 = scmp.eq.s32.totalorder %s11, 0
    %p45 = por %p43, %p44
    %p46 = scmp.ne.s32.totalorder %s35, %s38
    %p47 = scmp.eq.s32.totalorder %s16, 1
    %p48 = por %p46, %p47
    %p49 = scmp.ne.s32.totalorder %s38, %s39
    %p50 = scmp.eq.s32.totalorder %s16, 0
    %p51 = por %p49, %p50
    %p52 = scmp.ne.s32.totalorder %s38, %s39
    %p53 = scmp.eq.s32.totalorder %s17, 1
    %p54 = por %p52, %p53
    %p56 = scmp.ne.s32.totalorder %s39, %s55
    %p57 = scmp.eq.s32.totalorder %s17, 0
    %p58 = por %p56, %p57
    %s59 = ssub.s32 %s18, %s30
    %s60 = ssub.s32 %s19, %s26
    %s61 = sor.u32 %s59, %s60
    %p62 = scmp.eq.s32.totalorder %s61, 0
    %s64 = sadd.s32 %s63, 1
    %s65 = scalar_select %p62, %s63, %s64
    %p68 = pneg %p62
    %p69 = scmp.eq.s32.totalorder %s11, 1
    %p70 = por %p68, %p69
    %p71 = scmp.ne.s32.totalorder %s63, %s66
    %p72 = scmp.eq.s32.totalorder %s11, 0
    %p73 = por %p71, %p72
    %p74 = scmp.ne.s32.totalorder %s63, %s66
    %p75 = scmp.eq.s32.totalorder %s16, 1
    %p76 = por %p74, %p75
    %p77 = scmp.ne.s32.totalorder %s66, %s67
    %p78 = scmp.eq.s32.totalorder %s16, 0
    %p79 = por %p77, %p78
    %p80 = scmp.ne.s32.totalorder %s66, %s67
    %p81 = scmp.eq.s32.totalorder %s17, 1
    %p82 = por %p80, %p81
    %p84 = scmp.ne.s32.totalorder %s67, %s83
    %p85 = scmp.eq.s32.totalorder %s17, 0
    %p86 = por %p84, %p85
    %s88 = sadd.s32 %s87, 1
    %p91 = scmp.eq.s32.totalorder %s11, 1
    %p92 = scmp.ne.s32.totalorder %s87, %s89
    %p93 = scmp.eq.s32.totalorder %s11, 0
    %p94 = por %p92, %p93
    %p95 = scmp.ne.s32.totalorder %s87, %s89
    %p96 = scmp.eq.s32.totalorder %s16, 1
    %p97 = por %p95, %p96
    %p98 = scmp.ne.s32.totalorder %s89, %s90
    %p99 = scmp.eq.s32.totalorder %s16, 0
    %p100 = por %p98, %p99
    %p101 = scmp.ne.s32.totalorder %s89, %s90
    %p102 = scmp.eq.s32.totalorder %s17, 1
    %p103 = por %p101, %p102
    %p105 = scmp.ne.s32.totalorder %s90, %s104
    %p106 = scmp.eq.s32.totalorder %s17, 0
    %p107 = por %p105, %p106
    %s109 = sadd.s32 %s108, 1
    %p112 = scmp.eq.s32.totalorder %s11, 1
    %p113 = scmp.ne.s32.totalorder %s108, %s110
    %p114 = scmp.eq.s32.totalorder %s11, 0
    %p115 = por %p113, %p114
    %p116 = scmp.ne.s32.totalorder %s108, %s110
    %p117 = scmp.eq.s32.totalorder %s16, 1
    %p118 = por %p116, %p117
    %p119 = scmp.ne.s32.totalorder %s110, %s111
    %p120 = scmp.eq.s32.totalorder %s16, 0
    %p121 = por %p119, %p120
    %p122 = scmp.ne.s32.totalorder %s110, %s111
    %p123 = scmp.eq.s32.totalorder %s17, 1
    %p124 = por %p122, %p123
    %p126 = scmp.ne.s32.totalorder %s111, %s125
    %p127 = scmp.eq.s32.totalorder %s17, 0
    %p128 = por %p126, %p127
    %s130 = sadd.s32 %s129, 1
    %p133 = scmp.eq.s32.totalorder %s11, 1
    %p134 = scmp.ne.s32.totalorder %s129, %s131
    %p135 = scmp.eq.s32.totalorder %s11, 0
    %p136 = por %p134, %p135
    %p137 = scmp.ne.s32.totalorder %s129, %s131
    %p138 = scmp.eq.s32.totalorder %s16, 1
    %p139 = por %p137, %p138
    %p140 = scmp.ne.s32.totalorder %s131, %s132
    %p141 = scmp.eq.s32.totalorder %s16, 0
    %p142 = por %p140, %p141
    %p143 = scmp.ne.s32.totalorder %s131, %s132
    %p144 = scmp.eq.s32.totalorder %s17, 1
    %p145 = por %p143, %p144
    %p147 = scmp.ne.s32.totalorder %s132, %s146
    %p148 = scmp.eq.s32.totalorder %s17, 0
    %p149 = por %p147, %p148
    %s150 = ssub.s32 %s18, %s30
    %s151 = ssub.s32 %s19, %s26
    %s152 = sor.u32 %s150, %s151
    %p153 = scmp.eq.s32.totalorder %s152, 0
    %s155 = sadd.s32 %s154, 1
    %s156 = scalar_select %p153, %s154, %s155
    %p159 = pneg %p153
    %p160 = scmp.eq.s32.totalorder %s11, 1
    %p161 = por %p159, %p160
    %p162 = scmp.ne.s32.totalorder %s154, %s157
    %p163 = scmp.eq.s32.totalorder %s11, 0
    %p164 = por %p162, %p163
    %p165 = scmp.ne.s32.totalorder %s154, %s157
    %p166 = scmp.eq.s32.totalorder %s16, 1
    %p167 = por %p165, %p166
    %p168 = scmp.ne.s32.totalorder %s157, %s158
    %p169 = scmp.eq.s32.totalorder %s16, 0
    %p170 = por %p168, %p169
    %p171 = scmp.ne.s32.totalorder %s157, %s158
    %p172 = scmp.eq.s32.totalorder %s17, 1
    %p173 = por %p171, %p172
    %p175 = scmp.ne.s32.totalorder %s158, %s174
    %p176 = scmp.eq.s32.totalorder %s17, 0
    %p177 = por %p175, %p176
    %p178 = scmp.le.s32.totalorder 1, %s11
    %p179 = scmp.lt.s32.totalorder %s11, 3
    %p180 = pnand %p178, %p179
    %p181 = pneg %p180
    // Predicated region
    $region9: #{object_mask_forward.5} parent=5 // pred_check
      _
    $region10: #{object_mask_forward.5} parent=5 // pred_check_branch
      %183 = sbr.rel (%p180) target = $region12
    $region11: #{object_mask_forward.5} parent=5 // pred_region
      %s184 = ssub.s32 %s11, 1
      // Predicated region
      $region13: #{object_mask_forward.5} parent=11 // pred_check
        %p185 = pneg %p100
      $region14: #{object_mask_forward.5} parent=11 // pred_check_branch
        %187 = sbr.rel (%p185) target = $region16
      $region15: #{object_mask_forward.5} parent=11 // pred_region
        _
      $region16: #{object_mask_forward.5} parent=11 // pred_fallthru
        _
      // Predicated region
      $region17: #{object_mask_forward.5} parent=11 // pred_check
        %p188 = pneg %p121
      $region18: #{object_mask_forward.5} parent=11 // pred_check_branch
        %190 = sbr.rel (%p188) target = $region20
      $region19: #{object_mask_forward.5} parent=11 // pred_region
        _
      $region20: #{object_mask_forward.5} parent=11 // pred_fallthru
        _
      // Predicated region
      $region21: #{object_mask_forward.5} parent=11 // pred_check
        %p191 = pneg %p142
      $region22: #{object_mask_forward.5} parent=11 // pred_check_branch
        %193 = sbr.rel (%p191) target = $region24
      $region23: #{object_mask_forward.5} parent=11 // pred_region
        _
      $region24: #{object_mask_forward.5} parent=11 // pred_fallthru
        _
    $region12: #{object_mask_forward.5} parent=5 // pred_fallthru
      _
    %p194 = scmp.lt.s32.totalorder %s11, 2
    // Predicated region
    $region25: #{object_mask_forward.5} parent=5 // pred_check
      %p195 = pneg %p194
    $region26: #{object_mask_forward.5} parent=5 // pred_check_branch
      %197 = sbr.rel (%p195) target = $region28
    $region27: #{object_mask_forward.5} parent=5 // pred_region
      // Predicated region
      $region29: #{object_mask_forward.5} parent=27 // pred_check
        %p198 = pneg %p45
      $region30: #{object_mask_forward.5} parent=27 // pred_check_branch
        %200 = sbr.rel (%p198) target = $region32
      $region31: #{object_mask_forward.5} parent=27 // pred_region
        %s201 = smul.u32 2, %s19
        %p202 = scmp.lt.s32.totalorder %s18, 1
        %s203 = scalar_select %p202, %s18, 1
        %p204 = scmp.lt.s32.totalorder %s201, 1
        %s205 = scalar_select %p204, %s201, 1
        %s206 = smul.addr %s203, 2
        %s207 = sadd.s32 %s205, %s206
        %s208 = smul.addr %s207, 4
        %s209 = scalar_lea.vmem %s0, %s208
        %s210 = smul.u32 2, %s19
      $region32: #{object_mask_forward.5} parent=27 // pred_fallthru
        _
      // Predicated region
      $region33: #{object_mask_forward.5} parent=27 // pred_check
        %p211 = pneg %p73
      $region34: #{object_mask_forward.5} parent=27 // pred_check_branch
        %213 = sbr.rel (%p211) target = $region36
      $region35: #{object_mask_forward.5} parent=27 // pred_region
        %s214 = smul.u32 2, %s19
        %p215 = scmp.lt.s32.totalorder %s18, 1
        %s216 = scalar_select %p215, %s18, 1
        %p217 = scmp.lt.s32.totalorder %s214, 1
        %s218 = scalar_select %p217, %s214, 1
        %s219 = smul.addr %s216, 2
        %s220 = sadd.s32 %s218, %s219
        %s221 = smul.addr %s220, 4
        %s222 = scalar_lea.vmem %s1, %s221
        %s223 = smul.u32 2, %s19
      $region36: #{object_mask_forward.5} parent=27 // pred_fallthru
        _
    $region28: #{object_mask_forward.5} parent=5 // pred_fallthru
      _
    %p224 = scmp.le.s32.totalorder 1, %s11
    %p225 = scmp.lt.s32.totalorder %s11, 3
    %p226 = pnand %p224, %p225
    %p227 = pneg %p226
    // Predicated region
    $region37: #{object_mask_forward.5} parent=5 // pred_check
      _
    $region38: #{object_mask_forward.5} parent=5 // pred_check_branch
      %229 = sbr.rel (%p226) target = $region40
    $region39: #{object_mask_forward.5} parent=5 // pred_region
      %s230 = ssub.s32 %s11, 1
      %s231 = smul.u32 2, %s21
      %p232 = scmp.lt.s32.totalorder %s20, 1
      %s233 = scalar_select %p232, %s20, 1
      %p234 = scmp.lt.s32.totalorder %s231, 1
      %s235 = scalar_select %p234, %s231, 1
      %s236 = smul.addr %s233, 2
      %s237 = sadd.s32 %s235, %s236
      %s238 = smul.addr %s237, 4
      %s239 = scalar_lea.vmem %s0, %s238
      %p240 = pneg %p51
      %p241 = pneg %p48
      %s242 = smul.u32 2, %s21
      %p243 = scmp.lt.s32.totalorder %s20, 1
      %s244 = scalar_select %p243, %s20, 1
      %p245 = scmp.lt.s32.totalorder %s242, 1
      %s246 = scalar_select %p245, %s242, 1
      %s247 = smul.addr %s244, 2
      %s248 = sadd.s32 %s246, %s247
      %s249 = smul.addr %s248, 4
      %s250 = scalar_lea.vmem %s1, %s249
      %p251 = pneg %p79
      %p252 = pneg %p76
      %p253 = pneg %p100
      %p254 = pneg %p97
      %p255 = pneg %p121
      %p256 = pneg %p118
      %p257 = pneg %p142
      %p258 = pneg %p139
      %p259 = pneg %p170
      %p260 = pneg %p167
      %s261 = smul.u32 2, %s21
      %p262 = scmp.lt.s32.totalorder %s20, 1
      %s263 = scalar_select %p262, %s20, 1
      %p264 = scmp.lt.s32.totalorder %s261, 1
      %s265 = scalar_select %p264, %s261, 1
      %s266 = smul.addr %s263, 2
      %s267 = sadd.s32 %s265, %s266
      %s268 = smul.addr %s267, 4
      %s269 = scalar_lea.vmem %s5, %s268
      %s270 = smul.u32 2, %s21
      %p271 = scmp.lt.s32.totalorder %s20, 1
      %s272 = scalar_select %p271, %s20, 1
      %p273 = scmp.lt.s32.totalorder %s270, 1
      %s274 = scalar_select %p273, %s270, 1
      %s275 = smul.addr %s272, 2
      %s276 = sadd.s32 %s274, %s275
      %s277 = smul.addr %s276, 4
      %s278 = scalar_lea.vmem %s0, %s277
      %s279 = smul.u32 2, %s21
      %s280 = smul.u32 2, %s21
      %p281 = scmp.lt.s32.totalorder %s20, 1
      %s282 = scalar_select %p281, %s20, 1
      %p283 = scmp.lt.s32.totalorder %s280, 1
      %s284 = scalar_select %p283, %s280, 1
      %s285 = smul.addr %s282, 2
      %s286 = sadd.s32 %s284, %s285
      %s287 = smul.addr %s286, 4
      %s288 = scalar_lea.vmem %s1, %s287
      %s289 = smul.u32 2, %s21
      %s290 = smul.u32 2, %s21
      %p291 = scmp.lt.s32.totalorder %s20, 1
      %s292 = scalar_select %p291, %s20, 1
      %p293 = scmp.lt.s32.totalorder %s290, 1
      %s294 = scalar_select %p293, %s290, 1
      %s295 = smul.addr %s292, 2
      %s296 = sadd.s32 %s294, %s295
      %s297 = smul.addr %s296, 4
      %s298 = scalar_lea.vmem %s5, %s297
      %s299 = smul.u32 2, %s21
      %v300 = vld [vmem:[%s4] sm:$0x7]
      %302 = vset.pattern.permute.xlu0 0
      %303 = vperm.xlu0 %302, %v300
      %v304 = vpop.permute.xlu0 %303
      %v306 = vld [vmem:[%s278] sm:$0x77]
      %v307 = vld [vmem:[%s2] sm:$0x7]
      %309 = vset.pattern.permute.xlu0 0
      %310 = vperm.xlu0 %309, %v307
      %v311 = vpop.permute.xlu0 %310
      %v314 = vlaneseq
      %v315 = vshrl.u32 %v314, 7
      %v316 = vsub.s32 0, %v315
      %v317 = vrot.slane %v306, %v316
      %v318 = vlaneseq
      %v319 = vshrl.u32 %v318, 7
      %v320 = vsub.s32 4, %v319
      %v321 = vrot.slane %v306, %v320
      %v324 = vlaneseq
      %v325 = vshrl.u32 %v324, 7
      %v326 = vsub.s32 0, %v325
      %v327 = vrot.slane %v317, %v326
      %v328 = vlaneseq
      %v329 = vshrl.u32 %v328, 7
      %v330 = vsub.s32 0, %v329
      %v331 = vrot.slane %v321, %v330
      %v332 = vmul.f32 %v311, %v327
      %v333 = vmul.f32 %v311, %v331
      %v334 = vadd.f32 %v304, %v332
      %v335 = vadd.f32 %v304, %v333
      %336 = vset.pattern.permute.xlu0 1
      %337 = vperm.xlu0 %336, %v307
      %v338 = vpop.permute.xlu0 %337
      %v340 = vlaneseq
      %v341 = vshrl.u32 %v340, 7
      %v342 = vsub.s32 1, %v341
      %v343 = vrot.slane %v306, %v342
      %v344 = vlaneseq
      %v345 = vshrl.u32 %v344, 7
      %v346 = vsub.s32 5, %v345
      %v347 = vrot.slane %v306, %v346
      %v350 = vlaneseq
      %v351 = vshrl.u32 %v350, 7
      %v352 = vsub.s32 1, %v351
      %v353 = vrot.slane %v343, %v352
      %v354 = vlaneseq
      %v355 = vshrl.u32 %v354, 7
      %v356 = vsub.s32 1, %v355
      %v357 = vrot.slane %v347, %v356
      %v358 = vmul.f32 %v338, %v353
      %v359 = vmul.f32 %v338, %v357
      %v360 = vadd.f32 %v334, %v358
      %v361 = vadd.f32 %v335, %v359
      %362 = vset.pattern.permute.xlu0 2
      %363 = vperm.xlu0 %362, %v307
      %v364 = vpop.permute.xlu0 %363
      %v366 = vlaneseq
      %v367 = vshrl.u32 %v366, 7
      %v368 = vsub.s32 2, %v367
      %v369 = vrot.slane %v306, %v368
      %v370 = vlaneseq
      %v371 = vshrl.u32 %v370, 7
      %v372 = vsub.s32 6, %v371
      %v373 = vrot.slane %v306, %v372
      %v376 = vlaneseq
      %v377 = vshrl.u32 %v376, 7
      %v378 = vsub.s32 2, %v377
      %v379 = vrot.slane %v369, %v378
      %v380 = vlaneseq
      %v381 = vshrl.u32 %v380, 7
      %v382 = vsub.s32 2, %v381
      %v383 = vrot.slane %v373, %v382
      %v384 = vmul.f32 %v364, %v379
      %v385 = vmul.f32 %v364, %v383
      %v386 = vadd.f32 %v360, %v384
      %v387 = vadd.f32 %v361, %v385
      %v388 = vld [vmem:[%s288] sm:$0x77]
      %v389 = vld [vmem:[%s3] sm:$0x7]
      %391 = vset.pattern.permute.xlu0 0
      %392 = vperm.xlu0 %391, %v389
      %v393 = vpop.permute.xlu0 %392
      %v396 = vlaneseq
      %v397 = vshrl.u32 %v396, 7
      %v398 = vsub.s32 0, %v397
      %v399 = vrot.slane %v388, %v398
      %v400 = vlaneseq
      %v401 = vshrl.u32 %v400, 7
      %v402 = vsub.s32 4, %v401
      %v403 = vrot.slane %v388, %v402
      %v406 = vlaneseq
      %v407 = vshrl.u32 %v406, 7
      %v408 = vsub.s32 0, %v407
      %v409 = vrot.slane %v399, %v408
      %v410 = vlaneseq
      %v411 = vshrl.u32 %v410, 7
      %v412 = vsub.s32 0, %v411
      %v413 = vrot.slane %v403, %v412
      %v414 = vmul.f32 %v393, %v409
      %v415 = vmul.f32 %v393, %v413
      %v416 = vadd.f32 %v386, %v414
      %v417 = vadd.f32 %v387, %v415
      %418 = vset.pattern.permute.xlu0 1
      %419 = vperm.xlu0 %418, %v389
      %v420 = vpop.permute.xlu0 %419
      %v422 = vlaneseq
      %v423 = vshrl.u32 %v422, 7
      %v424 = vsub.s32 1, %v423
      %v425 = vrot.slane %v388, %v424
      %v426 = vlaneseq
      %v427 = vshrl.u32 %v426, 7
      %v428 = vsub.s32 5, %v427
      %v429 = vrot.slane %v388, %v428
      %v432 = vlaneseq
      %v433 = vshrl.u32 %v432, 7
      %v434 = vsub.s32 1, %v433
      %v435 = vrot.slane %v425, %v434
      %v436 = vlaneseq
      %v437 = vshrl.u32 %v436, 7
      %v438 = vsub.s32 1, %v437
      %v439 = vrot.slane %v429, %v438
      %v440 = vmul.f32 %v420, %v435
      %v441 = vmul.f32 %v420, %v439
      %v442 = vadd.f32 %v416, %v440
      %v443 = vadd.f32 %v417, %v441
      %444 = vset.pattern.permute.xlu0 2
      %445 = vperm.xlu0 %444, %v389
      %v446 = vpop.permute.xlu0 %445
      %v448 = vlaneseq
      %v449 = vshrl.u32 %v448, 7
      %v450 = vsub.s32 2, %v449
      %v451 = vrot.slane %v388, %v450
      %v452 = vlaneseq
      %v453 = vshrl.u32 %v452, 7
      %v454 = vsub.s32 6, %v453
      %v455 = vrot.slane %v388, %v454
      %v458 = vlaneseq
      %v459 = vshrl.u32 %v458, 7
      %v460 = vsub.s32 2, %v459
      %v461 = vrot.slane %v451, %v460
      %v462 = vlaneseq
      %v463 = vshrl.u32 %v462, 7
      %v464 = vsub.s32 2, %v463
      %v465 = vrot.slane %v455, %v464
      %v466 = vmul.f32 %v446, %v461
      %v467 = vmul.f32 %v446, %v465
      %v468 = vadd.f32 %v442, %v466
      %v469 = vadd.f32 %v443, %v467
      %v470 = vmax.f32 %v468, 1e-06
      %v471 = vmax.f32 %v469, 1e-06
      %v472 = vmin.f32 %v470, 1000000.0
      %v473 = vmin.f32 %v471, 1000000.0
      %vm474 = vcmask 1042432
      %v475 = vsel %vm474, %v472, -inf
      %v476 = vrot.slane %v475, 4
      %v477 = vmax.f32 %v475, %v476
      %v478 = vrot.slane %v477, 2
      %v479 = vmax.f32 %v477, %v478
      %v480 = vrot.slane %v479, 1
      %v481 = vmax.f32 %v479, %v480
      %v482 = vsel %vm474, %v473, -inf
      %v483 = vrot.slane %v482, 4
      %v484 = vmax.f32 %v482, %v483
      %v485 = vrot.slane %v484, 2
      %v486 = vmax.f32 %v484, %v485
      %v487 = vrot.slane %v486, 1
      %v488 = vmax.f32 %v486, %v487
      %v489 = vsub.f32 %v472, %v481
      %v490 = vsub.f32 %v473, %v488
      %v491 = vmul.f32 %v489, 1.442695
      %v492 = vpow.pop %v491
      %v493 = vmul.f32 %v490, 1.442695
      %v494 = vpow.pop %v493
      %v495 = vsel %vm474, %v492, 0.0
      %v496 = vrot.slane %v495, 4
      %v497 = vadd.f32 %v495, %v496
      %v498 = vrot.slane %v497, 2
      %v499 = vadd.f32 %v497, %v498
      %v500 = vrot.slane %v499, 1
      %v501 = vadd.f32 %v499, %v500
      %v502 = vsel %vm474, %v494, 0.0
      %v503 = vrot.slane %v502, 4
      %v504 = vadd.f32 %v502, %v503
      %v505 = vrot.slane %v504, 2
      %v506 = vadd.f32 %v504, %v505
      %v507 = vrot.slane %v506, 1
      %v508 = vadd.f32 %v506, %v507
      %v509 = vlog2.pop %v501
      %v510 = vmul.f32 %v509, 0.6931472
      %v511 = vlog2.pop %v508
      %v512 = vmul.f32 %v511, 0.6931472
      %v513 = vadd.f32 %v481, %v510
      %v514 = vadd.f32 %v488, %v512
      %v515 = vsub.f32 %v472, %v513
      %v516 = vsub.f32 %v473, %v514
      %v517 = vand.u32 2147483647, %v515
      %v518 = vand.u32 2147483647, %v516
      %v521 = vcombine.low %v517, %v518
      %523 = vst [vmem:[%s298] sm:$0x77] %v521
      %s524 = smul.u32 2, %s21
      %p525 = scmp.lt.s32.totalorder %s20, 1
      %s526 = scalar_select %p525, %s20, 1
      %p527 = scmp.lt.s32.totalorder %s524, 1
      %s528 = scalar_select %p527, %s524, 1
      %s529 = smul.addr %s526, 2
      %s530 = sadd.s32 %s528, %s529
      %s531 = smul.addr %s530, 4
      %s532 = scalar_lea.vmem %s5, %s531
      // Predicated region
      $region41: #{object_mask_forward.5} parent=39 // pred_check
        %p533 = pneg %p167
      $region42: #{object_mask_forward.5} parent=39 // pred_check_branch
        %535 = sbr.rel (%p533) target = $region44
      $region43: #{object_mask_forward.5} parent=39 // pred_region
        %s536 = smul.u32 2, %s21
      $region44: #{object_mask_forward.5} parent=39 // pred_fallthru
        _
    $region40: #{object_mask_forward.5} parent=5 // pred_fallthru
      _
    %p537 = scmp.le.s32.totalorder 2, %s11
    // Predicated region
    $region45: #{object_mask_forward.5} parent=5 // pred_check
      %p538 = pneg %p537
    $region46: #{object_mask_forward.5} parent=5 // pred_check_branch
      %540 = sbr.rel (%p538) target = $region48
    $region47: #{object_mask_forward.5} parent=5 // pred_region
      %s541 = ssub.s32 %s11, 2
      // Predicated region
      $region49: #{object_mask_forward.5} parent=47 // pred_check
        %p542 = pneg %p173
      $region50: #{object_mask_forward.5} parent=47 // pred_check_branch
        %544 = sbr.rel (%p542) target = $region52
      $region51: #{object_mask_forward.5} parent=47 // pred_region
        %s545 = smul.u32 2, %s23
        %p546 = scmp.lt.s32.totalorder %s22, 1
        %s547 = scalar_select %p546, %s22, 1
        %p548 = scmp.lt.s32.totalorder %s545, 1
        %s549 = scalar_select %p548, %s545, 1
        %s550 = smul.addr %s547, 2
        %s551 = sadd.s32 %s549, %s550
        %s552 = smul.addr %s551, 4
        %s553 = scalar_lea.vmem %s5, %s552
      $region52: #{object_mask_forward.5} parent=47 // pred_fallthru
        _
    $region48: #{object_mask_forward.5} parent=5 // pred_fallthru
      _
  $region6: #{object_mask_forward.5} parent=0 // loop_footer
    %s15 = sadd.s32 1, %s11
  $region7: #{object_mask_forward.5} parent=0 // loop_footer_branch
    %10 = sbr.rel target = $region3
  $region8: #{object_mask_forward.5} parent=0 // loop_exit
    _

</llo_original>
